<compile_context>
chip_gen: v5e
topology: v5e:2x2
jax: 0.10.0
libtpu: 0.0.40
codegen_flags: <defaults>
</compile_context>

<pallas_src>
import jax
import jax.numpy as jnp
from jax.experimental import pallas as pl
from jax.experimental.pallas import tpu as pltpu


# ----------------------------------------------------------------------------
# Kernel: one decoder step, fully VMEM-resident (toy sizes; see notes).
# ----------------------------------------------------------------------------
def _decoder_kernel(idx_ref, ctx_ref, h1_ref, c1_ref, h2_ref, c2_ref,
                    emb_ref, embT_ref, w1_ref, b1_ref, w2_ref, b2_ref,
                    fcb_ref,
                    logits_ref, h1o_ref, c1o_ref, h2o_ref, c2o_ref):
    B, H = ctx_ref.shape

    # ---- embedding lookup: direct row gather, indices read from SMEM ----
    # NOTE: dynamic-slice clamps out-of-range indices instead of raising like
    # nn.Embedding would.
    rows = [emb_ref[pl.ds(idx_ref[b], 1), :] for b in range(B)]
    emb = jnp.concatenate(rows, axis=0)                       # (B, H) f32

    ctx = ctx_ref[...]
    h1p = h1_ref[...]
    c1p = c1_ref[...]
    h2p = h2_ref[...]
    c2p = c2_ref[...]

    # ---- PyTorch LSTMCell math (gate order i, f, g, o), fused matmul ----
    def lstm_cell(x_cat_bf16, c_prev, w_ref, b_ref):
        # single MXU op: [x, h_prev] @ [Wih; Whh]  (bf16 operands, f32 acc)
        gates = jnp.dot(x_cat_bf16, w_ref[...],
                        preferred_element_type=jnp.float32) + b_ref[...]
        i = jax.nn.sigmoid(gates[:, 0 * H:1 * H])
        f = jax.nn.sigmoid(gates[:, 1 * H:2 * H])
        g = jnp.tanh(gates[:, 2 * H:3 * H])
        o = jax.nn.sigmoid(gates[:, 3 * H:4 * H])
        c_new = f * c_prev + i * g
        h_new = o * jnp.tanh(c_new)
        return h_new, c_new

    x1 = jnp.concatenate([emb, ctx, h1p], axis=1).astype(jnp.bfloat16)
    h1n, c1n = lstm_cell(x1, c1p, w1_ref, b1_ref)

    x2 = jnp.concatenate([h1n, h2p], axis=1).astype(jnp.bfloat16)
    h2n, c2n = lstm_cell(x2, c2p, w2_ref, b2_ref)

    # TODO(synk): nn.Dropout(0.3) is applied as eval-mode identity (inference
    # semantics); a training variant would draw a mask via pltpu.prng_*.

    # ---- tied-weight fc: logits = h2 @ emb_T + b  (emb_T pre-transposed) ----
    logits = jnp.dot(h2n.astype(jnp.bfloat16), embT_ref[...],
                     preferred_element_type=jnp.float32) + fcb_ref[...]

    logits_ref[...] = logits
    h1o_ref[...] = h1n
    c1o_ref[...] = c1n
    h2o_ref[...] = h2n
    c2o_ref[...] = c2n


# ----------------------------------------------------------------------------
# Parameter init (PyTorch-layout f32 params, deterministic)
# ----------------------------------------------------------------------------
def init_decoder_params(key, vocab_dim, lstm_dim):
    H = lstm_dim
    ks = jax.random.split(key, 10)

    def uni(k, shape, fan):
        bound = 1.0 / (fan ** 0.5)
        return jax.random.uniform(k, shape, jnp.float32, -bound, bound)

    return dict(
        embed_w=jax.random.normal(ks[0], (vocab_dim, H), jnp.float32),  # tied
        w_ih1=uni(ks[1], (4 * H, 2 * H), H),
        w_hh1=uni(ks[2], (4 * H, H), H),
        b_ih1=uni(ks[3], (4 * H,), H),
        b_hh1=uni(ks[4], (4 * H,), H),
        w_ih2=uni(ks[5], (4 * H, H), H),
        w_hh2=uni(ks[6], (4 * H, H), H),
        b_ih2=uni(ks[7], (4 * H,), H),
        b_hh2=uni(ks[8], (4 * H,), H),
        fc_b=uni(ks[9], (vocab_dim,), H),
    )


# ----------------------------------------------------------------------------
# One-time parameter preprocessing (hoisted out of the per-step path):
#   stack [Wih; Whh], fold biases, pre-transpose tied weight, cast to bf16.
# ----------------------------------------------------------------------------
def preprocess_params(params):
    V, H = params["embed_w"].shape
    w1 = jnp.concatenate([params["w_ih1"].T, params["w_hh1"].T],
                         axis=0).astype(jnp.bfloat16)          # (3H, 4H)
    w2 = jnp.concatenate([params["w_ih2"].T, params["w_hh2"].T],
                         axis=0).astype(jnp.bfloat16)          # (2H, 4H)
    b1 = (params["b_ih1"] + params["b_hh1"]).reshape(1, 4 * H)
    b2 = (params["b_ih2"] + params["b_hh2"]).reshape(1, 4 * H)
    return dict(
        emb=params["embed_w"].astype(jnp.float32),             # (V, H) gather
        emb_T=params["embed_w"].T.astype(jnp.bfloat16),        # (H, V) logits
        w1=w1, b1=b1, w2=w2, b2=b2,
        fc_b=params["fc_b"].reshape(1, V).astype(jnp.float32),
    )


# ----------------------------------------------------------------------------
# Wrapper: zero-state for first_step + single pallas_call (no per-step prep)
# ----------------------------------------------------------------------------
def decoder_forward(prep, x, context, hidden1, cell1, hidden2, cell2,
                    first_step):
    V, H = prep["emb"].shape
    B = x.shape[0]

    if first_step:
        z = jnp.zeros((B, H), jnp.float32)
        hidden1, cell1, hidden2, cell2 = z, z, z, z

    idx = x.astype(jnp.int32)                                  # (B,) in SMEM

    smem = pl.BlockSpec(memory_space=pltpu.MemorySpace.SMEM)
    vmem = pl.BlockSpec(memory_space=pltpu.MemorySpace.VMEM)

    flops = 2 * B * (3 * H * 4 * H + 2 * H * 4 * H) + 2 * B * H * V
    bytes_accessed = (prep["emb"].size * 4 + prep["emb_T"].size * 2
                      + prep["w1"].size * 2 + prep["w2"].size * 2
                      + (9 * B * H + 2 * B * V) * 4)
    cost = pl.CostEstimate(flops=flops, transcendentals=10 * B * H,
                           bytes_accessed=bytes_accessed)

    out_shapes = (
        jax.ShapeDtypeStruct((B, V), jnp.float32),   # logits
        jax.ShapeDtypeStruct((B, H), jnp.float32),   # hidden1
        jax.ShapeDtypeStruct((B, H), jnp.float32),   # cell1
        jax.ShapeDtypeStruct((B, H), jnp.float32),   # hidden2
        jax.ShapeDtypeStruct((B, H), jnp.float32),   # cell2
    )
    return pl.pallas_call(
        _decoder_kernel,
        out_shape=out_shapes,
        in_specs=[smem] + [vmem] * 12,
        out_specs=[vmem] * 5,
        cost_estimate=cost,
    )(idx, context, hidden1, cell1, hidden2, cell2,
      prep["emb"], prep["emb_T"], prep["w1"], prep["b1"],
      prep["w2"], prep["b2"], prep["fc_b"])


# ----------------------------------------------------------------------------
# Pure-JAX reference (mirrors the bf16 matmul operands for a tight check)
# ----------------------------------------------------------------------------
def decoder_reference(params, x, context, hidden1, cell1, hidden2, cell2,
                      first_step):
    V, H = params["embed_w"].shape
    B = x.shape[0]
    if first_step:
        z = jnp.zeros((B, H), jnp.float32)
        hidden1, cell1, hidden2, cell2 = z, z, z, z

    emb = params["embed_w"][x]                                  # (B, H)
    w1 = jnp.concatenate([params["w_ih1"].T, params["w_hh1"].T],
                         axis=0).astype(jnp.bfloat16)
    w2 = jnp.concatenate([params["w_ih2"].T, params["w_hh2"].T],
                         axis=0).astype(jnp.bfloat16)
    b1 = (params["b_ih1"] + params["b_hh1"])[None, :]
    b2 = (params["b_ih2"] + params["b_hh2"])[None, :]

    def cell(xcat, c_prev, w, b):
        g = jnp.dot(xcat.astype(jnp.bfloat16), w,
                    preferred_element_type=jnp.float32) + b
        i, f, gg, o = jnp.split(g, 4, axis=1)
        c_new = jax.nn.sigmoid(f) * c_prev + jax.nn.sigmoid(i) * jnp.tanh(gg)
        h_new = jax.nn.sigmoid(o) * jnp.tanh(c_new)
        return h_new, c_new

    h1, c1 = cell(jnp.concatenate([emb, context, hidden1], axis=1),
                  cell1, w1, b1)
    h2, c2 = cell(jnp.concatenate([h1, hidden2], axis=1), cell2, w2, b2)

    embT = params["embed_w"].T.astype(jnp.bfloat16)
    logits = jnp.dot(h2.astype(jnp.bfloat16), embT,
                     preferred_element_type=jnp.float32) + params["fc_b"][None]
    return logits, h1, c1, h2, c2


if __name__ == "__main__":
    VOCAB, HID, BATCH = 256, 128, 8

    key = jax.random.PRNGKey(0)
    kp, kx, kc = jax.random.split(key, 3)
    params = init_decoder_params(kp, VOCAB, HID)
    prep = preprocess_params(params)

    x = jax.random.randint(kx, (BATCH,), 0, VOCAB, dtype=jnp.int32)
    context = jax.random.normal(kc, (BATCH, HID), jnp.float32)
    z = jnp.zeros((BATCH, HID), jnp.float32)

    # first step (zero-initialized hidden/cell, as LSTMCell with hx=None)
    out1 = decoder_forward(prep, x, context, z, z, z, z, first_step=True)
    out1 = jax.block_until_ready(out1)

    # subsequent step reusing the returned states
    logits1, h1, c1, h2, c2 = out1
    out2 = decoder_forward(prep, x, context, h1, c1, h2, c2, first_step=False)
    out2 = jax.block_until_ready(out2)

    # correctness check vs pure-JAX reference (same bf16 weight quantization)
    ref1 = decoder_reference(params, x, context, z, z, z, z, first_step=True)
    ref2 = decoder_reference(params, x, context, h1, c1, h2, c2,
                             first_step=False)
    for got, want in list(zip(out1, ref1)) + list(zip(out2, ref2)):
        assert jnp.allclose(got, want, atol=2e-2, rtol=2e-2), "mismatch"

    print("KERNEL_OK")
</pallas_src>

<mosaic_0001>
module attributes {stable_mosaic.version = 11 : i64} {
  func.func @_decoder_kernel(%arg0: memref<8xi32, #tpu.memory_space<smem>>, %arg1: memref<8x128xf32, #tpu.memory_space<vmem>>, %arg2: memref<8x128xf32, #tpu.memory_space<vmem>>, %arg3: memref<8x128xf32, #tpu.memory_space<vmem>>, %arg4: memref<8x128xf32, #tpu.memory_space<vmem>>, %arg5: memref<8x128xf32, #tpu.memory_space<vmem>>, %arg6: memref<256x128xf32, #tpu.memory_space<vmem>>, %arg7: memref<128x256xbf16, #tpu.memory_space<vmem>>, %arg8: memref<384x512xbf16, #tpu.memory_space<vmem>>, %arg9: memref<1x512xf32, #tpu.memory_space<vmem>>, %arg10: memref<256x512xbf16, #tpu.memory_space<vmem>>, %arg11: memref<1x512xf32, #tpu.memory_space<vmem>>, %arg12: memref<1x256xf32, #tpu.memory_space<vmem>>, %arg13: memref<8x256xf32, #tpu.memory_space<vmem>>, %arg14: memref<8x128xf32, #tpu.memory_space<vmem>>, %arg15: memref<8x128xf32, #tpu.memory_space<vmem>>, %arg16: memref<8x128xf32, #tpu.memory_space<vmem>>, %arg17: memref<8x128xf32, #tpu.memory_space<vmem>>) attributes {dimension_semantics = [], scalar_prefetch = 0 : i64, scratch_operands = 0 : i64, tpu.core_type = #tpu.core_type<tc>} {
    %c0 = arith.constant 0 : index
    %0 = memref.load %arg0[%c0] : memref<8xi32, #tpu.memory_space<smem>>
    %1 = arith.index_cast %0 : i32 to index
    %c0_0 = arith.constant 0 : index
    %2 = vector.load %arg6[%1, %c0_0] : memref<256x128xf32, #tpu.memory_space<vmem>>, vector<1x128xf32>
    %c1 = arith.constant 1 : index
    %3 = memref.load %arg0[%c1] : memref<8xi32, #tpu.memory_space<smem>>
    %4 = arith.index_cast %3 : i32 to index
    %c0_1 = arith.constant 0 : index
    %5 = vector.load %arg6[%4, %c0_1] : memref<256x128xf32, #tpu.memory_space<vmem>>, vector<1x128xf32>
    %c2 = arith.constant 2 : index
    %6 = memref.load %arg0[%c2] : memref<8xi32, #tpu.memory_space<smem>>
    %7 = arith.index_cast %6 : i32 to index
    %c0_2 = arith.constant 0 : index
    %8 = vector.load %arg6[%7, %c0_2] : memref<256x128xf32, #tpu.memory_space<vmem>>, vector<1x128xf32>
    %c3 = arith.constant 3 : index
    %9 = memref.load %arg0[%c3] : memref<8xi32, #tpu.memory_space<smem>>
    %10 = arith.index_cast %9 : i32 to index
    %c0_3 = arith.constant 0 : index
    %11 = vector.load %arg6[%10, %c0_3] : memref<256x128xf32, #tpu.memory_space<vmem>>, vector<1x128xf32>
    %c4 = arith.constant 4 : index
    %12 = memref.load %arg0[%c4] : memref<8xi32, #tpu.memory_space<smem>>
    %13 = arith.index_cast %12 : i32 to index
    %c0_4 = arith.constant 0 : index
    %14 = vector.load %arg6[%13, %c0_4] : memref<256x128xf32, #tpu.memory_space<vmem>>, vector<1x128xf32>
    %c5 = arith.constant 5 : index
    %15 = memref.load %arg0[%c5] : memref<8xi32, #tpu.memory_space<smem>>
    %16 = arith.index_cast %15 : i32 to index
    %c0_5 = arith.constant 0 : index
    %17 = vector.load %arg6[%16, %c0_5] : memref<256x128xf32, #tpu.memory_space<vmem>>, vector<1x128xf32>
    %c6 = arith.constant 6 : index
    %18 = memref.load %arg0[%c6] : memref<8xi32, #tpu.memory_space<smem>>
    %19 = arith.index_cast %18 : i32 to index
    %c0_6 = arith.constant 0 : index
    %20 = vector.load %arg6[%19, %c0_6] : memref<256x128xf32, #tpu.memory_space<vmem>>, vector<1x128xf32>
    %c7 = arith.constant 7 : index
    %21 = memref.load %arg0[%c7] : memref<8xi32, #tpu.memory_space<smem>>
    %22 = arith.index_cast %21 : i32 to index
    %c0_7 = arith.constant 0 : index
    %23 = vector.load %arg6[%22, %c0_7] : memref<256x128xf32, #tpu.memory_space<vmem>>, vector<1x128xf32>
    %24 = tpu.concatenate %2, %5, %8, %11, %14, %17, %20, %23 in 0 : vector<1x128xf32>, vector<1x128xf32>, vector<1x128xf32>, vector<1x128xf32>, vector<1x128xf32>, vector<1x128xf32>, vector<1x128xf32>, vector<1x128xf32> -> vector<8x128xf32>
    %c0_8 = arith.constant 0 : index
    %c0_9 = arith.constant 0 : index
    %25 = vector.load %arg1[%c0_8, %c0_9] : memref<8x128xf32, #tpu.memory_space<vmem>>, vector<8x128xf32>
    %c0_10 = arith.constant 0 : index
    %c0_11 = arith.constant 0 : index
    %26 = vector.load %arg2[%c0_10, %c0_11] : memref<8x128xf32, #tpu.memory_space<vmem>>, vector<8x128xf32>
    %c0_12 = arith.constant 0 : index
    %c0_13 = arith.constant 0 : index
    %27 = vector.load %arg3[%c0_12, %c0_13] : memref<8x128xf32, #tpu.memory_space<vmem>>, vector<8x128xf32>
    %c0_14 = arith.constant 0 : index
    %c0_15 = arith.constant 0 : index
    %28 = vector.load %arg4[%c0_14, %c0_15] : memref<8x128xf32, #tpu.memory_space<vmem>>, vector<8x128xf32>
    %c0_16 = arith.constant 0 : index
    %c0_17 = arith.constant 0 : index
    %29 = vector.load %arg5[%c0_16, %c0_17] : memref<8x128xf32, #tpu.memory_space<vmem>>, vector<8x128xf32>
    %30 = tpu.concatenate %24, %25, %26 in 1 : vector<8x128xf32>, vector<8x128xf32>, vector<8x128xf32> -> vector<8x384xf32>
    %31 = arith.truncf %30 : vector<8x384xf32> to vector<8x384xbf16>
    %c0_18 = arith.constant 0 : index
    %c0_19 = arith.constant 0 : index
    %32 = vector.load %arg8[%c0_18, %c0_19] : memref<384x512xbf16, #tpu.memory_space<vmem>>, vector<384x512xbf16>
    %cst = arith.constant dense<0.000000e+00> : vector<8x512xf32>
    %33 = tpu.matmul %31, %32, %cst {dimension_numbers = #tpu.dot_dimension_numbers<[1], [0], [0], [1], [0, 0, 1, 1], [], []>} : vector<8x384xbf16>, vector<384x512xbf16>, vector<8x512xf32> -> vector<8x512xf32>
    %c0_20 = arith.constant 0 : index
    %c0_21 = arith.constant 0 : index
    %34 = vector.load %arg9[%c0_20, %c0_21] : memref<1x512xf32, #tpu.memory_space<vmem>>, vector<1x512xf32>
    %35 = vector.broadcast %34 : vector<1x512xf32> to vector<8x512xf32>
    %36 = arith.addf %33, %35 : vector<8x512xf32>
    %37 = vector.extract_strided_slice %36 {offsets = [0, 0], sizes = [8, 128], strides = [1, 1]} : vector<8x512xf32> to vector<8x128xf32>
    %38 = arith.negf %37 : vector<8x128xf32>
    %39 = math.exp %38 : vector<8x128xf32>
    %cst_22 = arith.constant 1.000000e+00 : f32
    %40 = vector.broadcast %cst_22 : f32 to vector<8x128xf32>
    %41 = arith.addf %40, %39 : vector<8x128xf32>
    %42 = arith.divf %40, %41 : vector<8x128xf32>
    %43 = vector.extract_strided_slice %36 {offsets = [0, 128], sizes = [8, 128], strides = [1, 1]} : vector<8x512xf32> to vector<8x128xf32>
    %44 = arith.negf %43 : vector<8x128xf32>
    %45 = math.exp %44 : vector<8x128xf32>
    %cst_23 = arith.constant 1.000000e+00 : f32
    %46 = vector.broadcast %cst_23 : f32 to vector<8x128xf32>
    %47 = arith.addf %46, %45 : vector<8x128xf32>
    %48 = arith.divf %46, %47 : vector<8x128xf32>
    %49 = vector.extract_strided_slice %36 {offsets = [0, 256], sizes = [8, 128], strides = [1, 1]} : vector<8x512xf32> to vector<8x128xf32>
    %50 = math.tanh %49 : vector<8x128xf32>
    %51 = vector.extract_strided_slice %36 {offsets = [0, 384], sizes = [8, 128], strides = [1, 1]} : vector<8x512xf32> to vector<8x128xf32>
    %52 = arith.negf %51 : vector<8x128xf32>
    %53 = math.exp %52 : vector<8x128xf32>
    %cst_24 = arith.constant 1.000000e+00 : f32
    %54 = vector.broadcast %cst_24 : f32 to vector<8x128xf32>
    %55 = arith.addf %54, %53 : vector<8x128xf32>
    %56 = arith.divf %54, %55 : vector<8x128xf32>
    %57 = arith.mulf %48, %27 : vector<8x128xf32>
    %58 = arith.mulf %42, %50 : vector<8x128xf32>
    %59 = arith.addf %57, %58 : vector<8x128xf32>
    %60 = math.tanh %59 : vector<8x128xf32>
    %61 = arith.mulf %56, %60 : vector<8x128xf32>
    %62 = tpu.concatenate %61, %28 in 1 : vector<8x128xf32>, vector<8x128xf32> -> vector<8x256xf32>
    %63 = arith.truncf %62 : vector<8x256xf32> to vector<8x256xbf16>
    %c0_25 = arith.constant 0 : index
    %c0_26 = arith.constant 0 : index
    %64 = vector.load %arg10[%c0_25, %c0_26] : memref<256x512xbf16, #tpu.memory_space<vmem>>, vector<256x512xbf16>
    %cst_27 = arith.constant dense<0.000000e+00> : vector<8x512xf32>
    %65 = tpu.matmul %63, %64, %cst_27 {dimension_numbers = #tpu.dot_dimension_numbers<[1], [0], [0], [1], [0, 0, 1, 1], [], []>} : vector<8x256xbf16>, vector<256x512xbf16>, vector<8x512xf32> -> vector<8x512xf32>
    %c0_28 = arith.constant 0 : index
    %c0_29 = arith.constant 0 : index
    %66 = vector.load %arg11[%c0_28, %c0_29] : memref<1x512xf32, #tpu.memory_space<vmem>>, vector<1x512xf32>
    %67 = vector.broadcast %66 : vector<1x512xf32> to vector<8x512xf32>
    %68 = arith.addf %65, %67 : vector<8x512xf32>
    %69 = vector.extract_strided_slice %68 {offsets = [0, 0], sizes = [8, 128], strides = [1, 1]} : vector<8x512xf32> to vector<8x128xf32>
    %70 = arith.negf %69 : vector<8x128xf32>
    %71 = math.exp %70 : vector<8x128xf32>
    %cst_30 = arith.constant 1.000000e+00 : f32
    %72 = vector.broadcast %cst_30 : f32 to vector<8x128xf32>
    %73 = arith.addf %72, %71 : vector<8x128xf32>
    %74 = arith.divf %72, %73 : vector<8x128xf32>
    %75 = vector.extract_strided_slice %68 {offsets = [0, 128], sizes = [8, 128], strides = [1, 1]} : vector<8x512xf32> to vector<8x128xf32>
    %76 = arith.negf %75 : vector<8x128xf32>
    %77 = math.exp %76 : vector<8x128xf32>
    %cst_31 = arith.constant 1.000000e+00 : f32
    %78 = vector.broadcast %cst_31 : f32 to vector<8x128xf32>
    %79 = arith.addf %78, %77 : vector<8x128xf32>
    %80 = arith.divf %78, %79 : vector<8x128xf32>
    %81 = vector.extract_strided_slice %68 {offsets = [0, 256], sizes = [8, 128], strides = [1, 1]} : vector<8x512xf32> to vector<8x128xf32>
    %82 = math.tanh %81 : vector<8x128xf32>
    %83 = vector.extract_strided_slice %68 {offsets = [0, 384], sizes = [8, 128], strides = [1, 1]} : vector<8x512xf32> to vector<8x128xf32>
    %84 = arith.negf %83 : vector<8x128xf32>
    %85 = math.exp %84 : vector<8x128xf32>
    %cst_32 = arith.constant 1.000000e+00 : f32
    %86 = vector.broadcast %cst_32 : f32 to vector<8x128xf32>
    %87 = arith.addf %86, %85 : vector<8x128xf32>
    %88 = arith.divf %86, %87 : vector<8x128xf32>
    %89 = arith.mulf %80, %29 : vector<8x128xf32>
    %90 = arith.mulf %74, %82 : vector<8x128xf32>
    %91 = arith.addf %89, %90 : vector<8x128xf32>
    %92 = math.tanh %91 : vector<8x128xf32>
    %93 = arith.mulf %88, %92 : vector<8x128xf32>
    %94 = arith.truncf %93 : vector<8x128xf32> to vector<8x128xbf16>
    %c0_33 = arith.constant 0 : index
    %c0_34 = arith.constant 0 : index
    %95 = vector.load %arg7[%c0_33, %c0_34] : memref<128x256xbf16, #tpu.memory_space<vmem>>, vector<128x256xbf16>
    %cst_35 = arith.constant dense<0.000000e+00> : vector<8x256xf32>
    %96 = tpu.matmul %94, %95, %cst_35 {dimension_numbers = #tpu.dot_dimension_numbers<[1], [0], [0], [1], [0, 0, 1, 1], [], []>} : vector<8x128xbf16>, vector<128x256xbf16>, vector<8x256xf32> -> vector<8x256xf32>
    %c0_36 = arith.constant 0 : index
    %c0_37 = arith.constant 0 : index
    %97 = vector.load %arg12[%c0_36, %c0_37] : memref<1x256xf32, #tpu.memory_space<vmem>>, vector<1x256xf32>
    %98 = vector.broadcast %97 : vector<1x256xf32> to vector<8x256xf32>
    %99 = arith.addf %96, %98 : vector<8x256xf32>
    %c0_38 = arith.constant 0 : index
    %c0_39 = arith.constant 0 : index
    %100 = vector.load %arg13[%c0_38, %c0_39] : memref<8x256xf32, #tpu.memory_space<vmem>>, vector<8x256xf32>
    tpu.vector_store %arg13[%c0_38, %c0_39], %99 {strides = array<i32>} : memref<8x256xf32, #tpu.memory_space<vmem>>, vector<8x256xf32>,
    %c0_40 = arith.constant 0 : index
    %c0_41 = arith.constant 0 : index
    %101 = vector.load %arg14[%c0_40, %c0_41] : memref<8x128xf32, #tpu.memory_space<vmem>>, vector<8x128xf32>
    tpu.vector_store %arg14[%c0_40, %c0_41], %61 {strides = array<i32>} : memref<8x128xf32, #tpu.memory_space<vmem>>, vector<8x128xf32>,
    %c0_42 = arith.constant 0 : index
    %c0_43 = arith.constant 0 : index
    %102 = vector.load %arg15[%c0_42, %c0_43] : memref<8x128xf32, #tpu.memory_space<vmem>>, vector<8x128xf32>
    tpu.vector_store %arg15[%c0_42, %c0_43], %59 {strides = array<i32>} : memref<8x128xf32, #tpu.memory_space<vmem>>, vector<8x128xf32>,
    %c0_44 = arith.constant 0 : index
    %c0_45 = arith.constant 0 : index
    %103 = vector.load %arg16[%c0_44, %c0_45] : memref<8x128xf32, #tpu.memory_space<vmem>>, vector<8x128xf32>
    tpu.vector_store %arg16[%c0_44, %c0_45], %93 {strides = array<i32>} : memref<8x128xf32, #tpu.memory_space<vmem>>, vector<8x128xf32>,
    %c0_46 = arith.constant 0 : index
    %c0_47 = arith.constant 0 : index
    %104 = vector.load %arg17[%c0_46, %c0_47] : memref<8x128xf32, #tpu.memory_space<vmem>>, vector<8x128xf32>
    tpu.vector_store %arg17[%c0_46, %c0_47], %91 {strides = array<i32>} : memref<8x128xf32, #tpu.memory_space<vmem>>, vector<8x128xf32>,
    return
  }
}

</mosaic_0001>

<llo_original>
// kernel: tpu_custom_call.1
$region0: #{tpu_custom_call.1}
  #allocation0 [shape = 'u32[]', space=smem, size = 0x4, offset = 0x4, fixed_abs, tag = 'smem constant byte address 0x4 - core index']
  #allocation1 [shape = 'u32[72,128]{1,0:T(1,128)}', space=vmem, size = 0x9000, scoped, tag = 'internal scratch']
  %s0 = inlined_call_operand.hbm [shape: s32[8], index: 0, kind: input, shape index: {}]
  %s1 = inlined_call_operand.hbm [shape: f32[8,128], index: 1, kind: input, shape index: {}]
  %s2 = inlined_call_operand.hbm [shape: f32[8,128], index: 2, kind: input, shape index: {}]
  %s3 = inlined_call_operand.hbm [shape: f32[8,128], index: 3, kind: input, shape index: {}]
  %s4 = inlined_call_operand.hbm [shape: f32[8,128], index: 4, kind: input, shape index: {}]
  %s5 = inlined_call_operand.hbm [shape: f32[8,128], index: 5, kind: input, shape index: {}]
  %s6 = inlined_call_operand.hbm [shape: f32[256,128], index: 6, kind: input, shape index: {}]
  %s7 = inlined_call_operand.hbm [shape: bf16[128,256], index: 7, kind: input, shape index: {}]
  %s8 = inlined_call_operand.hbm [shape: bf16[384,512], index: 8, kind: input, shape index: {}]
  %s9 = inlined_call_operand.vmem [shape: f32[1,512], index: 9, kind: input, shape index: {}]
  %s10 = inlined_call_operand.hbm [shape: bf16[256,512], index: 10, kind: input, shape index: {}]
  %s11 = inlined_call_operand.vmem [shape: f32[1,512], index: 11, kind: input, shape index: {}]
  %s12 = inlined_call_operand.vmem [shape: f32[1,256], index: 12, kind: input, shape index: {}]
  %s13 = inlined_call_operand.hbm [shape: f32[8,256], index: 13, kind: output, shape index: {0}]
  %s14 = inlined_call_operand.hbm [shape: f32[8,128], index: 14, kind: output, shape index: {1}]
  %s15 = inlined_call_operand.hbm [shape: f32[8,128], index: 15, kind: output, shape index: {2}]
  %s16 = inlined_call_operand.hbm [shape: f32[8,128], index: 16, kind: output, shape index: {3}]
  %s17 = inlined_call_operand.hbm [shape: f32[8,128], index: 17, kind: output, shape index: {4}]
  %18 = xla_tuple %s13, %s14, %s15, %s16, %s17
  %s19 = sld [smem:[#allocation0]]
  $region134: #{tpu_custom_call.1} parent=0
    _
  %s21 = ssub.s32 1, %s19
  %s22 = scalar_select 0, %s21, %s19
  $region1: #{tpu_custom_call.1} parent=0
    #allocation2 [shape = 'u8[512]{0}', space=smem, size = 0x200, scoped, tag = 'input window, operand 0, single buffered']
    #allocation3 [shape = 's32[1]{0}', space=sflag, size = 0x4, scoped, tag = 'scoped memory for tpu_custom_call.1']
    #allocation4 [shape = 's32[1]{0}', space=sflag, size = 0x4, scoped, tag = 'scoped memory for tpu_custom_call.1']
    #allocation5 [shape = 's32[1]{0}', space=sflag, size = 0x4, scoped, tag = 'scoped memory for tpu_custom_call.1']
    #allocation6 [shape = 'u8[4096]{0}', space=vmem, size = 0x1000, scoped, tag = 'input window, operand 1, single buffered']
    #allocation7 [shape = 'u8[4096]{0}', space=vmem, size = 0x1000, scoped, tag = 'input window, operand 2, single buffered']
    #allocation8 [shape = 's32[1]{0}', space=sflag, size = 0x4, scoped, tag = 'scoped memory for tpu_custom_call.1']
    #allocation9 [shape = 'u8[4096]{0}', space=vmem, size = 0x1000, scoped, tag = 'input window, operand 3, single buffered']
    #allocation10 [shape = 'u8[4096]{0}', space=vmem, size = 0x1000, scoped, tag = 'input window, operand 4, single buffered']
    #allocation11 [shape = 's32[1]{0}', space=sflag, size = 0x4, scoped, tag = 'scoped memory for tpu_custom_call.1']
    #allocation12 [shape = 'u8[4096]{0}', space=vmem, size = 0x1000, scoped, tag = 'input window, operand 5, single buffered']
    #allocation13 [shape = 'u8[131072]{0}', space=vmem, size = 0x20000, scoped, tag = 'input window, operand 6, single buffered']
    #allocation14 [shape = 's32[1]{0}', space=sflag, size = 0x4, scoped, tag = 'scoped memory for tpu_custom_call.1']
    #allocation15 [shape = 'u8[65536]{0}', space=vmem, size = 0x10000, scoped, tag = 'input window, operand 7, single buffered']
    #allocation16 [shape = 'u8[393216]{0}', space=vmem, size = 0x60000, scoped, tag = 'input window, operand 8, single buffered']
    #allocation17 [shape = 's32[1]{0}', space=sflag, size = 0x4, scoped, tag = 'scoped memory for tpu_custom_call.1']
    #allocation18 [shape = 'u8[262144]{0}', space=vmem, size = 0x40000, scoped, tag = 'input window, operand 10, single buffered']
    #allocation19 [shape = 'u8[8192]{0}', space=vmem, size = 0x2000, scoped, tag = 'output window, operand 0, single buffered']
    #allocation20 [shape = 'u8[4096]{0}', space=vmem, size = 0x1000, scoped, tag = 'output window, operand 1, single buffered']
    #allocation21 [shape = 's32[1]{0}', space=sflag, size = 0x4, scoped, tag = 'scoped memory for tpu_custom_call.1']
    #allocation22 [shape = 'u8[4096]{0}', space=vmem, size = 0x1000, scoped, tag = 'output window, operand 2, single buffered']
    #allocation23 [shape = 'u8[4096]{0}', space=vmem, size = 0x1000, scoped, tag = 'output window, operand 3, single buffered']
    #allocation24 [shape = 's32[1]{0}', space=sflag, size = 0x4, scoped, tag = 'scoped memory for tpu_custom_call.1']
    #allocation25 [shape = 'u8[4096]{0}', space=vmem, size = 0x1000, scoped, tag = 'output window, operand 4, single buffered']
    %23 = vsyncpa [#allocation5], 0
    %24 = vsyncpa [#allocation3], 0
    %25 = vsyncpa [#allocation8], 0
    %26 = vsyncpa [#allocation11], 0
    %27 = vsyncpa [#allocation14], 0
    %28 = vsyncpa [#allocation17], 0
    %29 = vsyncpa [#allocation4], 0
    %30 = vsyncpa [#allocation21], 0
    %31 = vsyncpa [#allocation24], 0
    // Predicated region
    $region2: #{tpu_custom_call.1} parent=1 // pred_check
      _
    $region3: #{tpu_custom_call.1} parent=1 // pred_check_branch
      %33 = sbr.rel (0) target = $region5
    $region4: #{tpu_custom_call.1} parent=1 // pred_region
      %35 = vsyncadd [#allocation5], 0
      %s37 = sshll.u32 %s0, 4
      %s38 = int_to_ptr.hbm [resolvable:$true] %s37
      %40 = dma.hbm_to_smem %s38, 16, [#allocation2], [#allocation5]
    $region5: #{tpu_custom_call.1} parent=1 // pred_fallthru
      _
    // Predicated region
    $region6: #{tpu_custom_call.1} parent=1 // pred_check
      _
    $region7: #{tpu_custom_call.1} parent=1 // pred_check_branch
      %42 = sbr.rel (0) target = $region9
    $region8: #{tpu_custom_call.1} parent=1 // pred_region
      %44 = vsyncadd [#allocation3], 0
      %s46 = sshll.u32 %s1, 4
      %s47 = int_to_ptr.hbm [resolvable:$true] %s46
      %s48 = sshll.u32 [#allocation6], 4
      %s49 = int_to_ptr.vmem [resolvable:$true] %s48
      %51 = dma.hbm_to_vmem [thread:$0]  %s47, 128, %s49, [#allocation3]
    $region9: #{tpu_custom_call.1} parent=1 // pred_fallthru
      _
    // Predicated region
    $region10: #{tpu_custom_call.1} parent=1 // pred_check
      _
    $region11: #{tpu_custom_call.1} parent=1 // pred_check_branch
      %53 = sbr.rel (0) target = $region13
    $region12: #{tpu_custom_call.1} parent=1 // pred_region
      %55 = vsyncadd [#allocation8], 0
      %s57 = sshll.u32 %s2, 4
      %s58 = int_to_ptr.hbm [resolvable:$true] %s57
      %s59 = sshll.u32 [#allocation7], 4
      %s60 = int_to_ptr.vmem [resolvable:$true] %s59
      %62 = dma.hbm_to_vmem [thread:$0]  %s58, 128, %s60, [#allocation8]
    $region13: #{tpu_custom_call.1} parent=1 // pred_fallthru
      _
    // Predicated region
    $region14: #{tpu_custom_call.1} parent=1 // pred_check
      _
    $region15: #{tpu_custom_call.1} parent=1 // pred_check_branch
      %64 = sbr.rel (0) target = $region17
    $region16: #{tpu_custom_call.1} parent=1 // pred_region
      %66 = vsyncadd [#allocation8], 0
      %s68 = sshll.u32 %s3, 4
      %s69 = int_to_ptr.hbm [resolvable:$true] %s68
      %s70 = sshll.u32 [#allocation9], 4
      %s71 = int_to_ptr.vmem [resolvable:$true] %s70
      %73 = dma.hbm_to_vmem [thread:$0]  %s69, 128, %s71, [#allocation8]
    $region17: #{tpu_custom_call.1} parent=1 // pred_fallthru
      _
    // Predicated region
    $region18: #{tpu_custom_call.1} parent=1 // pred_check
      _
    $region19: #{tpu_custom_call.1} parent=1 // pred_check_branch
      %75 = sbr.rel (0) target = $region21
    $region20: #{tpu_custom_call.1} parent=1 // pred_region
      %77 = vsyncadd [#allocation11], 0
      %s79 = sshll.u32 %s4, 4
      %s80 = int_to_ptr.hbm [resolvable:$true] %s79
      %s81 = sshll.u32 [#allocation10], 4
      %s82 = int_to_ptr.vmem [resolvable:$true] %s81
      %84 = dma.hbm_to_vmem [thread:$0]  %s80, 128, %s82, [#allocation11]
    $region21: #{tpu_custom_call.1} parent=1 // pred_fallthru
      _
    // Predicated region
    $region22: #{tpu_custom_call.1} parent=1 // pred_check
      _
    $region23: #{tpu_custom_call.1} parent=1 // pred_check_branch
      %86 = sbr.rel (0) target = $region25
    $region24: #{tpu_custom_call.1} parent=1 // pred_region
      %88 = vsyncadd [#allocation11], 0
      %s90 = sshll.u32 %s5, 4
      %s91 = int_to_ptr.hbm [resolvable:$true] %s90
      %s92 = sshll.u32 [#allocation12], 4
      %s93 = int_to_ptr.vmem [resolvable:$true] %s92
      %95 = dma.hbm_to_vmem [thread:$0]  %s91, 128, %s93, [#allocation11]
    $region25: #{tpu_custom_call.1} parent=1 // pred_fallthru
      _
    // Predicated region
    $region26: #{tpu_custom_call.1} parent=1 // pred_check
      _
    $region27: #{tpu_custom_call.1} parent=1 // pred_check_branch
      %97 = sbr.rel (0) target = $region29
    $region28: #{tpu_custom_call.1} parent=1 // pred_region
      %99 = vsyncadd [#allocation14], 0
      %s100 = sshll.u32 %s6, 4
      %s101 = int_to_ptr.hbm [resolvable:$true] %s100
      %s102 = sshll.u32 [#allocation13], 4
      %s103 = int_to_ptr.vmem [resolvable:$true] %s102
      %108 = dma.hbm_to_vmem [thread:$0]  %s101, 4096, %s103, [#allocation14], 128, 128, 8
    $region29: #{tpu_custom_call.1} parent=1 // pred_fallthru
      _
    // Predicated region
    $region30: #{tpu_custom_call.1} parent=1 // pred_check
      _
    $region31: #{tpu_custom_call.1} parent=1 // pred_check_branch
      %110 = sbr.rel (0) target = $region33
    $region32: #{tpu_custom_call.1} parent=1 // pred_region
      %112 = vsyncadd [#allocation14], 0
      %s113 = sshll.u32 %s7, 4
      %s114 = int_to_ptr.hbm [resolvable:$true] %s113
      %s115 = sshll.u32 [#allocation15], 4
      %s116 = int_to_ptr.vmem [resolvable:$true] %s115
      %121 = dma.hbm_to_vmem [thread:$0]  %s114, 2048, %s116, [#allocation14], 128, 128, 8
    $region33: #{tpu_custom_call.1} parent=1 // pred_fallthru
      _
    // Predicated region
    $region34: #{tpu_custom_call.1} parent=1 // pred_check
      _
    $region35: #{tpu_custom_call.1} parent=1 // pred_check_branch
      %123 = sbr.rel (0) target = $region37
    $region36: #{tpu_custom_call.1} parent=1 // pred_region
      %125 = vsyncadd [#allocation17], 0
      %s126 = sshll.u32 %s8, 4
      %s127 = int_to_ptr.hbm [resolvable:$true] %s126
      %s128 = sshll.u32 [#allocation16], 4
      %s129 = int_to_ptr.vmem [resolvable:$true] %s128
      %134 = dma.hbm_to_vmem [thread:$0]  %s127, 12288, %s129, [#allocation17], 256, 256, 16
    $region37: #{tpu_custom_call.1} parent=1 // pred_fallthru
      _
    // Predicated region
    $region38: #{tpu_custom_call.1} parent=1 // pred_check
      _
    $region39: #{tpu_custom_call.1} parent=1 // pred_check_branch
      %136 = sbr.rel (0) target = $region41
    $region40: #{tpu_custom_call.1} parent=1 // pred_region
      _
    $region41: #{tpu_custom_call.1} parent=1 // pred_fallthru
      _
    // Predicated region
    $region42: #{tpu_custom_call.1} parent=1 // pred_check
      _
    $region43: #{tpu_custom_call.1} parent=1 // pred_check_branch
      %138 = sbr.rel (0) target = $region45
    $region44: #{tpu_custom_call.1} parent=1 // pred_region
      %140 = vsyncadd [#allocation17], 0
      %s141 = sshll.u32 %s10, 4
      %s142 = int_to_ptr.hbm [resolvable:$true] %s141
      %s143 = sshll.u32 [#allocation18], 4
      %s144 = int_to_ptr.vmem [resolvable:$true] %s143
      %149 = dma.hbm_to_vmem [thread:$0]  %s142, 8192, %s144, [#allocation17], 256, 256, 16
    $region45: #{tpu_custom_call.1} parent=1 // pred_fallthru
      _
    // Predicated region
    $region46: #{tpu_custom_call.1} parent=1 // pred_check
      _
    $region47: #{tpu_custom_call.1} parent=1 // pred_check_branch
      %151 = sbr.rel (0) target = $region49
    $region48: #{tpu_custom_call.1} parent=1 // pred_region
      _
    $region49: #{tpu_custom_call.1} parent=1 // pred_fallthru
      _
    // Predicated region
    $region50: #{tpu_custom_call.1} parent=1 // pred_check
      _
    $region51: #{tpu_custom_call.1} parent=1 // pred_check_branch
      %153 = sbr.rel (0) target = $region53
    $region52: #{tpu_custom_call.1} parent=1 // pred_region
      _
    $region53: #{tpu_custom_call.1} parent=1 // pred_fallthru
      _
    // Predicated region
    $region54: #{tpu_custom_call.1} parent=1 // pred_check
      _
    $region55: #{tpu_custom_call.1} parent=1 // pred_check_branch
      %155 = sbr.rel (0) target = $region57
    $region56: #{tpu_custom_call.1} parent=1 // pred_region
      %157 = dma.done [#allocation5], 16
    $region57: #{tpu_custom_call.1} parent=1 // pred_fallthru
      _
    // Predicated region
    $region58: #{tpu_custom_call.1} parent=1 // pred_check
      _
    $region59: #{tpu_custom_call.1} parent=1 // pred_check_branch
      %159 = sbr.rel (0) target = $region61
    $region60: #{tpu_custom_call.1} parent=1 // pred_region
      %161 = dma.done [#allocation3], 128
    $region61: #{tpu_custom_call.1} parent=1 // pred_fallthru
      _
    // Predicated region
    $region62: #{tpu_custom_call.1} parent=1 // pred_check
      _
    $region63: #{tpu_custom_call.1} parent=1 // pred_check_branch
      %163 = sbr.rel (0) target = $region65
    $region64: #{tpu_custom_call.1} parent=1 // pred_region
      %165 = dma.done [#allocation8], 128
    $region65: #{tpu_custom_call.1} parent=1 // pred_fallthru
      _
    // Predicated region
    $region66: #{tpu_custom_call.1} parent=1 // pred_check
      _
    $region67: #{tpu_custom_call.1} parent=1 // pred_check_branch
      %167 = sbr.rel (0) target = $region69
    $region68: #{tpu_custom_call.1} parent=1 // pred_region
      %169 = dma.done [#allocation8], 128
    $region69: #{tpu_custom_call.1} parent=1 // pred_fallthru
      _
    // Predicated region
    $region70: #{tpu_custom_call.1} parent=1 // pred_check
      _
    $region71: #{tpu_custom_call.1} parent=1 // pred_check_branch
      %171 = sbr.rel (0) target = $region73
    $region72: #{tpu_custom_call.1} parent=1 // pred_region
      %173 = dma.done [#allocation11], 128
    $region73: #{tpu_custom_call.1} parent=1 // pred_fallthru
      _
    // Predicated region
    $region74: #{tpu_custom_call.1} parent=1 // pred_check
      _
    $region75: #{tpu_custom_call.1} parent=1 // pred_check_branch
      %175 = sbr.rel (0) target = $region77
    $region76: #{tpu_custom_call.1} parent=1 // pred_region
      %177 = dma.done [#allocation11], 128
    $region77: #{tpu_custom_call.1} parent=1 // pred_fallthru
      _
    // Predicated region
    $region78: #{tpu_custom_call.1} parent=1 // pred_check
      _
    $region79: #{tpu_custom_call.1} parent=1 // pred_check_branch
      %179 = sbr.rel (0) target = $region81
    $region80: #{tpu_custom_call.1} parent=1 // pred_region
      %181 = dma.done [#allocation14], 4096
    $region81: #{tpu_custom_call.1} parent=1 // pred_fallthru
      _
    // Predicated region
    $region82: #{tpu_custom_call.1} parent=1 // pred_check
      _
    $region83: #{tpu_custom_call.1} parent=1 // pred_check_branch
      %183 = sbr.rel (0) target = $region85
    $region84: #{tpu_custom_call.1} parent=1 // pred_region
      %185 = dma.done [#allocation14], 2048
    $region85: #{tpu_custom_call.1} parent=1 // pred_fallthru
      _
    // Predicated region
    $region86: #{tpu_custom_call.1} parent=1 // pred_check
      _
    $region87: #{tpu_custom_call.1} parent=1 // pred_check_branch
      %187 = sbr.rel (0) target = $region89
    $region88: #{tpu_custom_call.1} parent=1 // pred_region
      %189 = dma.done [#allocation17], 12288
    $region89: #{tpu_custom_call.1} parent=1 // pred_fallthru
      _
    // Predicated region
    $region90: #{tpu_custom_call.1} parent=1 // pred_check
      _
    $region91: #{tpu_custom_call.1} parent=1 // pred_check_branch
      %191 = sbr.rel (0) target = $region93
    $region92: #{tpu_custom_call.1} parent=1 // pred_region
      %193 = dma.done [#allocation17], 8192
    $region93: #{tpu_custom_call.1} parent=1 // pred_fallthru
      _
    %194 = sfence
    %s195 = sld [smem:[#allocation2]]
    %s196 = scalar_lea.vmem [#allocation13], %s195
    %v197 = vld [vmem:[%s196] sm:$0x1]
    %s198 = sld [smem:[#allocation2 + $0x1]]
    %s199 = scalar_lea.vmem [#allocation13], %s198
    %v200 = vld [vmem:[%s199] sm:$0x1]
    %s201 = sld [smem:[#allocation2 + $0x2]]
    %s202 = scalar_lea.vmem [#allocation13], %s201
    %v203 = vld [vmem:[%s202] sm:$0x1]
    %s204 = sld [smem:[#allocation2 + $0x3]]
    %s205 = scalar_lea.vmem [#allocation13], %s204
    %v206 = vld [vmem:[%s205] sm:$0x1]
    %s207 = sld [smem:[#allocation2 + $0x4]]
    %s208 = scalar_lea.vmem [#allocation13], %s207
    %v209 = vld [vmem:[%s208] sm:$0x1]
    %s210 = sld [smem:[#allocation2 + $0x5]]
    %s211 = scalar_lea.vmem [#allocation13], %s210
    %v212 = vld [vmem:[%s211] sm:$0x1]
    %s213 = sld [smem:[#allocation2 + $0x6]]
    %s214 = scalar_lea.vmem [#allocation13], %s213
    %v215 = vld [vmem:[%s214] sm:$0x1]
    %s216 = sld [smem:[#allocation2 + $0x7]]
    %s217 = scalar_lea.vmem [#allocation13], %s216
    %v218 = vld [vmem:[%s217] sm:$0x1]
    %v220 = vrot.slane %v200, 7
    %v223 = vrot.slane %v203, 6
    %v226 = vrot.slane %v206, 5
    %v229 = vrot.slane %v209, 4
    %v232 = vrot.slane %v212, 3
    %v235 = vrot.slane %v215, 2
    %v238 = vrot.slane %v218, 1
    %vm240 = vcmask 1040384
    %v241 = vsel %vm240, %v197, %v220
    %vm242 = vcmask 1041408
    %v243 = vsel %vm242, %v241, %v223
    %vm244 = vcmask 1042432
    %v245 = vsel %vm244, %v243, %v226
    %vm246 = vcmask 1043456
    %v247 = vsel %vm246, %v245, %v229
    %vm248 = vcmask 1044480
    %v249 = vsel %vm248, %v247, %v232
    %vm250 = vcmask 1045504
    %v251 = vsel %vm250, %v249, %v235
    %vm252 = vcmask 1046528
    %v253 = vsel %vm252, %v251, %v238
    %v254 = vld [vmem:[#allocation6] sm:$0xff]
    %v255 = vld [vmem:[#allocation7] sm:$0xff]
    %v256 = vld [vmem:[#allocation9] sm:$0xff]
    %v257 = vld [vmem:[#allocation10] sm:$0xff]
    %v258 = vld [vmem:[#allocation12] sm:$0xff]
    %v259 = vpack.c.bf16 %v253, %v253
    %v260 = vpack.c.bf16 %v254, %v254
    %v261 = vpack.c.bf16 %v255, %v255
    %v262 = vld [vmem:[#allocation16] sm:$0xff]
    %v263 = vld [vmem:[#allocation16 + $0x8] sm:$0xff]
    %v264 = vld [vmem:[#allocation16 + $0x10] sm:$0xff]
    %v265 = vld [vmem:[#allocation16 + $0x18] sm:$0xff]
    %v266 = vld [vmem:[#allocation16 + $0x20] sm:$0xff]
    %v267 = vld [vmem:[#allocation16 + $0x28] sm:$0xff]
    %v268 = vld [vmem:[#allocation16 + $0x30] sm:$0xff]
    %v269 = vld [vmem:[#allocation16 + $0x38] sm:$0xff]
    %v270 = vld [vmem:[#allocation16 + $0x40] sm:$0xff]
    %v271 = vld [vmem:[#allocation16 + $0x48] sm:$0xff]
    %v272 = vld [vmem:[#allocation16 + $0x50] sm:$0xff]
    %v273 = vld [vmem:[#allocation16 + $0x58] sm:$0xff]
    %v274 = vld [vmem:[#allocation16 + $0x60] sm:$0xff]
    %v275 = vld [vmem:[#allocation16 + $0x68] sm:$0xff]
    %v276 = vld [vmem:[#allocation16 + $0x70] sm:$0xff]
    %v277 = vld [vmem:[#allocation16 + $0x78] sm:$0xff]
    %v278 = vld [vmem:[#allocation16 + $0x80] sm:$0xff]
    %v279 = vld [vmem:[#allocation16 + $0x88] sm:$0xff]
    %v280 = vld [vmem:[#allocation16 + $0x90] sm:$0xff]
    %v281 = vld [vmem:[#allocation16 + $0x98] sm:$0xff]
    %v282 = vld [vmem:[#allocation16 + $0xa0] sm:$0xff]
    %v283 = vld [vmem:[#allocation16 + $0xa8] sm:$0xff]
    %v284 = vld [vmem:[#allocation16 + $0xb0] sm:$0xff]
    %v285 = vld [vmem:[#allocation16 + $0xb8] sm:$0xff]
    %v286 = vld [vmem:[#allocation16 + $0xc0] sm:$0xff]
    %v287 = vld [vmem:[#allocation16 + $0xc8] sm:$0xff]
    %v288 = vld [vmem:[#allocation16 + $0xd0] sm:$0xff]
    %v289 = vld [vmem:[#allocation16 + $0xd8] sm:$0xff]
    %v290 = vld [vmem:[#allocation16 + $0xe0] sm:$0xff]
    %v291 = vld [vmem:[#allocation16 + $0xe8] sm:$0xff]
    %v292 = vld [vmem:[#allocation16 + $0xf0] sm:$0xff]
    %v293 = vld [vmem:[#allocation16 + $0xf8] sm:$0xff]
    %v294 = vld [vmem:[#allocation16 + $0x100] sm:$0xff]
    %v295 = vld [vmem:[#allocation16 + $0x108] sm:$0xff]
    %v296 = vld [vmem:[#allocation16 + $0x110] sm:$0xff]
    %v297 = vld [vmem:[#allocation16 + $0x118] sm:$0xff]
    %v298 = vld [vmem:[#allocation16 + $0x120] sm:$0xff]
    %v299 = vld [vmem:[#allocation16 + $0x128] sm:$0xff]
    %v300 = vld [vmem:[#allocation16 + $0x130] sm:$0xff]
    %v301 = vld [vmem:[#allocation16 + $0x138] sm:$0xff]
    %v302 = vld [vmem:[#allocation16 + $0x140] sm:$0xff]
    %v303 = vld [vmem:[#allocation16 + $0x148] sm:$0xff]
    %v304 = vld [vmem:[#allocation16 + $0x150] sm:$0xff]
    %v305 = vld [vmem:[#allocation16 + $0x158] sm:$0xff]
    %v306 = vld [vmem:[#allocation16 + $0x160] sm:$0xff]
    %v307 = vld [vmem:[#allocation16 + $0x168] sm:$0xff]
    %v308 = vld [vmem:[#allocation16 + $0x170] sm:$0xff]
    %v309 = vld [vmem:[#allocation16 + $0x178] sm:$0xff]
    %v310 = vld [vmem:[#allocation16 + $0x180] sm:$0xff]
    %v311 = vld [vmem:[#allocation16 + $0x188] sm:$0xff]
    %v312 = vld [vmem:[#allocation16 + $0x190] sm:$0xff]
    %v313 = vld [vmem:[#allocation16 + $0x198] sm:$0xff]
    %v314 = vld [vmem:[#allocation16 + $0x1a0] sm:$0xff]
    %v315 = vld [vmem:[#allocation16 + $0x1a8] sm:$0xff]
    %v316 = vld [vmem:[#allocation16 + $0x1b0] sm:$0xff]
    %v317 = vld [vmem:[#allocation16 + $0x1b8] sm:$0xff]
    %v318 = vld [vmem:[#allocation16 + $0x1c0] sm:$0xff]
    %v319 = vld [vmem:[#allocation16 + $0x1c8] sm:$0xff]
    %v320 = vld [vmem:[#allocation16 + $0x1d0] sm:$0xff]
    %v321 = vld [vmem:[#allocation16 + $0x1d8] sm:$0xff]
    %v322 = vld [vmem:[#allocation16 + $0x1e0] sm:$0xff]
    %v323 = vld [vmem:[#allocation16 + $0x1e8] sm:$0xff]
    %v324 = vld [vmem:[#allocation16 + $0x1f0] sm:$0xff]
    %v325 = vld [vmem:[#allocation16 + $0x1f8] sm:$0xff]
    %v326 = vld [vmem:[#allocation16 + $0x200] sm:$0xff]
    %v327 = vld [vmem:[#allocation16 + $0x208] sm:$0xff]
    %v328 = vld [vmem:[#allocation16 + $0x210] sm:$0xff]
    %v329 = vld [vmem:[#allocation16 + $0x218] sm:$0xff]
    %v330 = vld [vmem:[#allocation16 + $0x220] sm:$0xff]
    %v331 = vld [vmem:[#allocation16 + $0x228] sm:$0xff]
    %v332 = vld [vmem:[#allocation16 + $0x230] sm:$0xff]
    %v333 = vld [vmem:[#allocation16 + $0x238] sm:$0xff]
    %v334 = vld [vmem:[#allocation16 + $0x240] sm:$0xff]
    %v335 = vld [vmem:[#allocation16 + $0x248] sm:$0xff]
    %v336 = vld [vmem:[#allocation16 + $0x250] sm:$0xff]
    %v337 = vld [vmem:[#allocation16 + $0x258] sm:$0xff]
    %v338 = vld [vmem:[#allocation16 + $0x260] sm:$0xff]
    %v339 = vld [vmem:[#allocation16 + $0x268] sm:$0xff]
    %v340 = vld [vmem:[#allocation16 + $0x270] sm:$0xff]
    %v341 = vld [vmem:[#allocation16 + $0x278] sm:$0xff]
    %v342 = vld [vmem:[#allocation16 + $0x280] sm:$0xff]
    %v343 = vld [vmem:[#allocation16 + $0x288] sm:$0xff]
    %v344 = vld [vmem:[#allocation16 + $0x290] sm:$0xff]
    %v345 = vld [vmem:[#allocation16 + $0x298] sm:$0xff]
    %v346 = vld [vmem:[#allocation16 + $0x2a0] sm:$0xff]
    %v347 = vld [vmem:[#allocation16 + $0x2a8] sm:$0xff]
    %v348 = vld [vmem:[#allocation16 + $0x2b0] sm:$0xff]
    %v349 = vld [vmem:[#allocation16 + $0x2b8] sm:$0xff]
    %v350 = vld [vmem:[#allocation16 + $0x2c0] sm:$0xff]
    %v351 = vld [vmem:[#allocation16 + $0x2c8] sm:$0xff]
    %v352 = vld [vmem:[#allocation16 + $0x2d0] sm:$0xff]
    %v353 = vld [vmem:[#allocation16 + $0x2d8] sm:$0xff]
    %v354 = vld [vmem:[#allocation16 + $0x2e0] sm:$0xff]
    %v355 = vld [vmem:[#allocation16 + $0x2e8] sm:$0xff]
    %v356 = vld [vmem:[#allocation16 + $0x2f0] sm:$0xff]
    %v357 = vld [vmem:[#allocation16 + $0x2f8] sm:$0xff]
    %v358 = vld [vmem:[%s9] sm:$0xf]
    %v360 = vperm.slane %v358, 0
    %v361 = vperm.slane %v358, 1
    %v362 = vperm.slane %v358, 2
    %v363 = vperm.slane %v358, 3
    %v464 = vunpack.c.l.b16 %v262
    %v465 = vunpack.c.h.b16 %v262
    %v466 = vunpack.c.l.b16 %v263
    %v467 = vunpack.c.h.b16 %v263
    %v468 = vunpack.c.l.b16 %v264
    %v469 = vunpack.c.h.b16 %v264
    %v470 = vunpack.c.l.b16 %v265
    %v471 = vunpack.c.h.b16 %v265
    %v472 = vunpack.c.l.b16 %v266
    %v473 = vunpack.c.h.b16 %v266
    %v474 = vunpack.c.l.b16 %v267
    %v475 = vunpack.c.h.b16 %v267
    %v476 = vunpack.c.l.b16 %v268
    %v477 = vunpack.c.h.b16 %v268
    %v478 = vunpack.c.l.b16 %v269
    %v479 = vunpack.c.h.b16 %v269
    %v480 = vunpack.c.l.b16 %v270
    %v481 = vunpack.c.h.b16 %v270
    %v482 = vunpack.c.l.b16 %v271
    %v483 = vunpack.c.h.b16 %v271
    %v484 = vunpack.c.l.b16 %v272
    %v485 = vunpack.c.h.b16 %v272
    %v486 = vunpack.c.l.b16 %v273
    %v487 = vunpack.c.h.b16 %v273
    %v488 = vunpack.c.l.b16 %v274
    %v489 = vunpack.c.h.b16 %v274
    %v490 = vunpack.c.l.b16 %v275
    %v491 = vunpack.c.h.b16 %v275
    %v492 = vunpack.c.l.b16 %v276
    %v493 = vunpack.c.h.b16 %v276
    %v494 = vunpack.c.l.b16 %v277
    %v495 = vunpack.c.h.b16 %v277
    %v496 = vunpack.c.l.b16 %v278
    %v497 = vunpack.c.h.b16 %v278
    %v498 = vunpack.c.l.b16 %v279
    %v499 = vunpack.c.h.b16 %v279
    %v500 = vunpack.c.l.b16 %v280
    %v501 = vunpack.c.h.b16 %v280
    %v502 = vunpack.c.l.b16 %v281
    %v503 = vunpack.c.h.b16 %v281
    %v504 = vunpack.c.l.b16 %v282
    %v505 = vunpack.c.h.b16 %v282
    %v506 = vunpack.c.l.b16 %v283
    %v507 = vunpack.c.h.b16 %v283
    %v508 = vunpack.c.l.b16 %v284
    %v509 = vunpack.c.h.b16 %v284
    %v510 = vunpack.c.l.b16 %v285
    %v511 = vunpack.c.h.b16 %v285
    %v512 = vunpack.c.l.b16 %v286
    %v513 = vunpack.c.h.b16 %v286
    %v514 = vunpack.c.l.b16 %v287
    %v515 = vunpack.c.h.b16 %v287
    %v516 = vunpack.c.l.b16 %v288
    %v517 = vunpack.c.h.b16 %v288
    %v518 = vunpack.c.l.b16 %v289
    %v519 = vunpack.c.h.b16 %v289
    %v520 = vunpack.c.l.b16 %v290
    %v521 = vunpack.c.h.b16 %v290
    %v522 = vunpack.c.l.b16 %v291
    %v523 = vunpack.c.h.b16 %v291
    %v524 = vunpack.c.l.b16 %v292
    %v525 = vunpack.c.h.b16 %v292
    %v526 = vunpack.c.l.b16 %v293
    %v527 = vunpack.c.h.b16 %v293
    %v528 = vunpack.c.l.b16 %v294
    %v529 = vunpack.c.h.b16 %v294
    %v530 = vunpack.c.l.b16 %v295
    %v531 = vunpack.c.h.b16 %v295
    %v532 = vunpack.c.l.b16 %v296
    %v533 = vunpack.c.h.b16 %v296
    %v534 = vunpack.c.l.b16 %v297
    %v535 = vunpack.c.h.b16 %v297
    %v536 = vunpack.c.l.b16 %v298
    %v537 = vunpack.c.h.b16 %v298
    %v538 = vunpack.c.l.b16 %v299
    %v539 = vunpack.c.h.b16 %v299
    %v540 = vunpack.c.l.b16 %v300
    %v541 = vunpack.c.h.b16 %v300
    %v542 = vunpack.c.l.b16 %v301
    %v543 = vunpack.c.h.b16 %v301
    %v544 = vunpack.c.l.b16 %v302
    %v545 = vunpack.c.h.b16 %v302
    %v546 = vunpack.c.l.b16 %v303
    %v547 = vunpack.c.h.b16 %v303
    %v548 = vunpack.c.l.b16 %v304
    %v549 = vunpack.c.h.b16 %v304
    %v550 = vunpack.c.l.b16 %v305
    %v551 = vunpack.c.h.b16 %v305
    %v552 = vunpack.c.l.b16 %v306
    %v553 = vunpack.c.h.b16 %v306
    %v554 = vunpack.c.l.b16 %v307
    %v555 = vunpack.c.h.b16 %v307
    %v556 = vunpack.c.l.b16 %v308
    %v557 = vunpack.c.h.b16 %v308
    %v558 = vunpack.c.l.b16 %v309
    %v559 = vunpack.c.h.b16 %v309
    %v560 = vunpack.c.l.b16 %v310
    %v561 = vunpack.c.h.b16 %v310
    %v562 = vunpack.c.l.b16 %v311
    %v563 = vunpack.c.h.b16 %v311
    %v564 = vunpack.c.l.b16 %v312
    %v565 = vunpack.c.h.b16 %v312
    %v566 = vunpack.c.l.b16 %v313
    %v567 = vunpack.c.h.b16 %v313
    %v568 = vunpack.c.l.b16 %v314
    %v569 = vunpack.c.h.b16 %v314
    %v570 = vunpack.c.l.b16 %v315
    %v571 = vunpack.c.h.b16 %v315
    %v572 = vunpack.c.l.b16 %v316
    %v573 = vunpack.c.h.b16 %v316
    %v574 = vunpack.c.l.b16 %v317
    %v575 = vunpack.c.h.b16 %v317
    %v576 = vunpack.c.l.b16 %v318
    %v577 = vunpack.c.h.b16 %v318
    %v578 = vunpack.c.l.b16 %v319
    %v579 = vunpack.c.h.b16 %v319
    %v580 = vunpack.c.l.b16 %v320
    %v581 = vunpack.c.h.b16 %v320
    %v582 = vunpack.c.l.b16 %v321
    %v583 = vunpack.c.h.b16 %v321
    %v584 = vunpack.c.l.b16 %v322
    %v585 = vunpack.c.h.b16 %v322
    %v586 = vunpack.c.l.b16 %v323
    %v587 = vunpack.c.h.b16 %v323
    %v588 = vunpack.c.l.b16 %v324
    %v589 = vunpack.c.h.b16 %v324
    %v590 = vunpack.c.l.b16 %v325
    %v591 = vunpack.c.h.b16 %v325
    %v592 = vunpack.c.l.b16 %v326
    %v593 = vunpack.c.h.b16 %v326
    %v594 = vunpack.c.l.b16 %v327
    %v595 = vunpack.c.h.b16 %v327
    %v596 = vunpack.c.l.b16 %v328
    %v597 = vunpack.c.h.b16 %v328
    %v598 = vunpack.c.l.b16 %v329
    %v599 = vunpack.c.h.b16 %v329
    %v600 = vunpack.c.l.b16 %v330
    %v601 = vunpack.c.h.b16 %v330
    %v602 = vunpack.c.l.b16 %v331
    %v603 = vunpack.c.h.b16 %v331
    %v604 = vunpack.c.l.b16 %v332
    %v605 = vunpack.c.h.b16 %v332
    %v606 = vunpack.c.l.b16 %v333
    %v607 = vunpack.c.h.b16 %v333
    %v608 = vunpack.c.l.b16 %v334
    %v609 = vunpack.c.h.b16 %v334
    %v610 = vunpack.c.l.b16 %v335
    %v611 = vunpack.c.h.b16 %v335
    %v612 = vunpack.c.l.b16 %v336
    %v613 = vunpack.c.h.b16 %v336
    %v614 = vunpack.c.l.b16 %v337
    %v615 = vunpack.c.h.b16 %v337
    %v616 = vunpack.c.l.b16 %v338
    %v617 = vunpack.c.h.b16 %v338
    %v618 = vunpack.c.l.b16 %v339
    %v619 = vunpack.c.h.b16 %v339
    %v620 = vunpack.c.l.b16 %v340
    %v621 = vunpack.c.h.b16 %v340
    %v622 = vunpack.c.l.b16 %v341
    %v623 = vunpack.c.h.b16 %v341
    %v624 = vunpack.c.l.b16 %v342
    %v625 = vunpack.c.h.b16 %v342
    %v626 = vunpack.c.l.b16 %v343
    %v627 = vunpack.c.h.b16 %v343
    %v628 = vunpack.c.l.b16 %v344
    %v629 = vunpack.c.h.b16 %v344
    %v630 = vunpack.c.l.b16 %v345
    %v631 = vunpack.c.h.b16 %v345
    %v632 = vunpack.c.l.b16 %v346
    %v633 = vunpack.c.h.b16 %v346
    %v634 = vunpack.c.l.b16 %v347
    %v635 = vunpack.c.h.b16 %v347
    %v636 = vunpack.c.l.b16 %v348
    %v637 = vunpack.c.h.b16 %v348
    %v638 = vunpack.c.l.b16 %v349
    %v639 = vunpack.c.h.b16 %v349
    %v640 = vunpack.c.l.b16 %v350
    %v641 = vunpack.c.h.b16 %v350
    %v642 = vunpack.c.l.b16 %v351
    %v643 = vunpack.c.h.b16 %v351
    %v644 = vunpack.c.l.b16 %v352
    %v645 = vunpack.c.h.b16 %v352
    %v646 = vunpack.c.l.b16 %v353
    %v647 = vunpack.c.h.b16 %v353
    %v648 = vunpack.c.l.b16 %v354
    %v649 = vunpack.c.h.b16 %v354
    %v650 = vunpack.c.l.b16 %v355
    %v651 = vunpack.c.h.b16 %v355
    %v652 = vunpack.c.l.b16 %v356
    %v653 = vunpack.c.h.b16 %v356
    %v654 = vunpack.c.l.b16 %v357
    %v655 = vunpack.c.h.b16 %v357
    %v656 = vpack.c.b16 %v468, %v464
    %v657 = vpack.c.b16 %v469, %v465
    %v658 = vpack.c.b16 %v470, %v466
    %v659 = vpack.c.b16 %v471, %v467
    %v660 = vpack.c.b16 %v476, %v472
    %v661 = vpack.c.b16 %v477, %v473
    %v662 = vpack.c.b16 %v478, %v474
    %v663 = vpack.c.b16 %v479, %v475
    %v664 = vpack.c.b16 %v484, %v480
    %v665 = vpack.c.b16 %v485, %v481
    %v666 = vpack.c.b16 %v486, %v482
    %v667 = vpack.c.b16 %v487, %v483
    %v668 = vpack.c.b16 %v492, %v488
    %v669 = vpack.c.b16 %v493, %v489
    %v670 = vpack.c.b16 %v494, %v490
    %v671 = vpack.c.b16 %v495, %v491
    %v672 = vpack.c.b16 %v500, %v496
    %v673 = vpack.c.b16 %v501, %v497
    %v674 = vpack.c.b16 %v502, %v498
    %v675 = vpack.c.b16 %v503, %v499
    %v676 = vpack.c.b16 %v508, %v504
    %v677 = vpack.c.b16 %v509, %v505
    %v678 = vpack.c.b16 %v510, %v506
    %v679 = vpack.c.b16 %v511, %v507
    %v680 = vpack.c.b16 %v516, %v512
    %v681 = vpack.c.b16 %v517, %v513
    %v682 = vpack.c.b16 %v518, %v514
    %v683 = vpack.c.b16 %v519, %v515
    %v684 = vpack.c.b16 %v524, %v520
    %v685 = vpack.c.b16 %v525, %v521
    %v686 = vpack.c.b16 %v526, %v522
    %v687 = vpack.c.b16 %v527, %v523
    %v688 = vpack.c.b16 %v532, %v528
    %v689 = vpack.c.b16 %v533, %v529
    %v690 = vpack.c.b16 %v534, %v530
    %v691 = vpack.c.b16 %v535, %v531
    %v692 = vpack.c.b16 %v540, %v536
    %v693 = vpack.c.b16 %v541, %v537
    %v694 = vpack.c.b16 %v542, %v538
    %v695 = vpack.c.b16 %v543, %v539
    %v696 = vpack.c.b16 %v548, %v544
    %v697 = vpack.c.b16 %v549, %v545
    %v698 = vpack.c.b16 %v550, %v546
    %v699 = vpack.c.b16 %v551, %v547
    %v700 = vpack.c.b16 %v556, %v552
    %v701 = vpack.c.b16 %v557, %v553
    %v702 = vpack.c.b16 %v558, %v554
    %v703 = vpack.c.b16 %v559, %v555
    %v704 = vpack.c.b16 %v564, %v560
    %v705 = vpack.c.b16 %v565, %v561
    %v706 = vpack.c.b16 %v566, %v562
    %v707 = vpack.c.b16 %v567, %v563
    %v708 = vpack.c.b16 %v572, %v568
    %v709 = vpack.c.b16 %v573, %v569
    %v710 = vpack.c.b16 %v574, %v570
    %v711 = vpack.c.b16 %v575, %v571
    %v712 = vpack.c.b16 %v580, %v576
    %v713 = vpack.c.b16 %v581, %v577
    %v714 = vpack.c.b16 %v582, %v578
    %v715 = vpack.c.b16 %v583, %v579
    %v716 = vpack.c.b16 %v588, %v584
    %v717 = vpack.c.b16 %v589, %v585
    %v718 = vpack.c.b16 %v590, %v586
    %v719 = vpack.c.b16 %v591, %v587
    %v720 = vpack.c.b16 %v596, %v592
    %v721 = vpack.c.b16 %v597, %v593
    %v722 = vpack.c.b16 %v598, %v594
    %v723 = vpack.c.b16 %v599, %v595
    %v724 = vpack.c.b16 %v604, %v600
    %v725 = vpack.c.b16 %v605, %v601
    %v726 = vpack.c.b16 %v606, %v602
    %v727 = vpack.c.b16 %v607, %v603
    %v728 = vpack.c.b16 %v612, %v608
    %v729 = vpack.c.b16 %v613, %v609
    %v730 = vpack.c.b16 %v614, %v610
    %v731 = vpack.c.b16 %v615, %v611
    %v732 = vpack.c.b16 %v620, %v616
    %v733 = vpack.c.b16 %v621, %v617
    %v734 = vpack.c.b16 %v622, %v618
    %v735 = vpack.c.b16 %v623, %v619
    %v736 = vpack.c.b16 %v628, %v624
    %v737 = vpack.c.b16 %v629, %v625
    %v738 = vpack.c.b16 %v630, %v626
    %v739 = vpack.c.b16 %v631, %v627
    %v740 = vpack.c.b16 %v636, %v632
    %v741 = vpack.c.b16 %v637, %v633
    %v742 = vpack.c.b16 %v638, %v634
    %v743 = vpack.c.b16 %v639, %v635
    %v744 = vpack.c.b16 %v644, %v640
    %v745 = vpack.c.b16 %v645, %v641
    %v746 = vpack.c.b16 %v646, %v642
    %v747 = vpack.c.b16 %v647, %v643
    %v748 = vpack.c.b16 %v652, %v648
    %v749 = vpack.c.b16 %v653, %v649
    %v750 = vpack.c.b16 %v654, %v650
    %v751 = vpack.c.b16 %v655, %v651
    %848 = vmatpush.bf16.msra.mxu0 %v684
    %849 = vmatpush.bf16.msra.mxu0 %v680
    %850 = vmatpush.bf16.msra.mxu0 %v676
    %851 = vmatpush.bf16.msra.mxu0 %v672
    %852 = vmatpush.bf16.msra.mxu0 %v668
    %853 = vmatpush.bf16.msra.mxu0 %v664
    %854 = vmatpush.bf16.msra.mxu0 %v660
    %855 = vmatpush.bf16.msra.mxu0 %v656
    %856 = vmatmul.bf16.gmra.mxu0 %v259
    %v857 = vpop.f32.mrf.mxu0
    %v858 = vadd.f32 %v360, %v857
    %v859 = vpop.f32.mrf.mxu0
    %860 = vdwg.mxu0
    %861 = vmatpush.bf16.msra.mxu0 %v716
    %862 = vmatpush.bf16.msra.mxu0 %v712
    %863 = vmatpush.bf16.msra.mxu0 %v708
    %864 = vmatpush.bf16.msra.mxu0 %v704
    %865 = vmatpush.bf16.msra.mxu0 %v700
    %866 = vmatpush.bf16.msra.mxu0 %v696
    %867 = vmatpush.bf16.msra.mxu0 %v692
    %868 = vmatpush.bf16.msra.mxu0 %v688
    %869 = vmatmul.bf16.gmra.mxu0 %v260
    %v870 = vpop.f32.mrf.mxu0
    %v871 = vadd.f32 %v858, %v870
    %v872 = vpop.f32.mrf.mxu0
    %873 = vdwg.mxu0
    %874 = vmatpush.bf16.msra.mxu0 %v748
    %875 = vmatpush.bf16.msra.mxu0 %v744
    %876 = vmatpush.bf16.msra.mxu0 %v740
    %877 = vmatpush.bf16.msra.mxu0 %v736
    %878 = vmatpush.bf16.msra.mxu0 %v732
    %879 = vmatpush.bf16.msra.mxu0 %v728
    %880 = vmatpush.bf16.msra.mxu0 %v724
    %881 = vmatpush.bf16.msra.mxu0 %v720
    %882 = vmatmul.bf16.gmra.mxu0 %v261
    %v883 = vpop.f32.mrf.mxu0
    %v884 = vadd.f32 %v871, %v883
    %v885 = vpop.f32.mrf.mxu0
    %886 = vdwg.mxu0
    %887 = vmatpush.bf16.msra.mxu0 %v685
    %888 = vmatpush.bf16.msra.mxu0 %v681
    %889 = vmatpush.bf16.msra.mxu0 %v677
    %890 = vmatpush.bf16.msra.mxu0 %v673
    %891 = vmatpush.bf16.msra.mxu0 %v669
    %892 = vmatpush.bf16.msra.mxu0 %v665
    %893 = vmatpush.bf16.msra.mxu0 %v661
    %894 = vmatpush.bf16.msra.mxu0 %v657
    %895 = vmatmul.bf16.gmra.mxu0 %v259
    %v896 = vpop.f32.mrf.mxu0
    %v897 = vadd.f32 %v361, %v896
    %v898 = vpop.f32.mrf.mxu0
    %899 = vdwg.mxu0
    %900 = vmatpush.bf16.msra.mxu0 %v717
    %901 = vmatpush.bf16.msra.mxu0 %v713
    %902 = vmatpush.bf16.msra.mxu0 %v709
    %903 = vmatpush.bf16.msra.mxu0 %v705
    %904 = vmatpush.bf16.msra.mxu0 %v701
    %905 = vmatpush.bf16.msra.mxu0 %v697
    %906 = vmatpush.bf16.msra.mxu0 %v693
    %907 = vmatpush.bf16.msra.mxu0 %v689
    %908 = vmatmul.bf16.gmra.mxu0 %v260
    %v909 = vpop.f32.mrf.mxu0
    %v910 = vadd.f32 %v897, %v909
    %v911 = vpop.f32.mrf.mxu0
    %912 = vdwg.mxu0
    %913 = vmatpush.bf16.msra.mxu0 %v749
    %914 = vmatpush.bf16.msra.mxu0 %v745
    %915 = vmatpush.bf16.msra.mxu0 %v741
    %916 = vmatpush.bf16.msra.mxu0 %v737
    %917 = vmatpush.bf16.msra.mxu0 %v733
    %918 = vmatpush.bf16.msra.mxu0 %v729
    %919 = vmatpush.bf16.msra.mxu0 %v725
    %920 = vmatpush.bf16.msra.mxu0 %v721
    %921 = vmatmul.bf16.gmra.mxu0 %v261
    %v922 = vpop.f32.mrf.mxu0
    %v923 = vadd.f32 %v910, %v922
    %v924 = vpop.f32.mrf.mxu0
    %925 = vdwg.mxu0
    %926 = vmatpush.bf16.msra.mxu0 %v686
    %927 = vmatpush.bf16.msra.mxu0 %v682
    %928 = vmatpush.bf16.msra.mxu0 %v678
    %929 = vmatpush.bf16.msra.mxu0 %v674
    %930 = vmatpush.bf16.msra.mxu0 %v670
    %931 = vmatpush.bf16.msra.mxu0 %v666
    %932 = vmatpush.bf16.msra.mxu0 %v662
    %933 = vmatpush.bf16.msra.mxu0 %v658
    %934 = vmatmul.bf16.gmra.mxu0 %v259
    %v935 = vpop.f32.mrf.mxu0
    %v936 = vadd.f32 %v362, %v935
    %v937 = vpop.f32.mrf.mxu0
    %938 = vdwg.mxu0
    %939 = vmatpush.bf16.msra.mxu0 %v718
    %940 = vmatpush.bf16.msra.mxu0 %v714
    %941 = vmatpush.bf16.msra.mxu0 %v710
    %942 = vmatpush.bf16.msra.mxu0 %v706
    %943 = vmatpush.bf16.msra.mxu0 %v702
    %944 = vmatpush.bf16.msra.mxu0 %v698
    %945 = vmatpush.bf16.msra.mxu0 %v694
    %946 = vmatpush.bf16.msra.mxu0 %v690
    %947 = vmatmul.bf16.gmra.mxu0 %v260
    %v948 = vpop.f32.mrf.mxu0
    %v949 = vadd.f32 %v936, %v948
    %v950 = vpop.f32.mrf.mxu0
    %951 = vdwg.mxu0
    %952 = vmatpush.bf16.msra.mxu0 %v750
    %953 = vmatpush.bf16.msra.mxu0 %v746
    %954 = vmatpush.bf16.msra.mxu0 %v742
    %955 = vmatpush.bf16.msra.mxu0 %v738
    %956 = vmatpush.bf16.msra.mxu0 %v734
    %957 = vmatpush.bf16.msra.mxu0 %v730
    %958 = vmatpush.bf16.msra.mxu0 %v726
    %959 = vmatpush.bf16.msra.mxu0 %v722
    %960 = vmatmul.bf16.gmra.mxu0 %v261
    %v961 = vpop.f32.mrf.mxu0
    %v962 = vadd.f32 %v949, %v961
    %v963 = vpop.f32.mrf.mxu0
    %964 = vdwg.mxu0
    %965 = vmatpush.bf16.msra.mxu0 %v687
    %966 = vmatpush.bf16.msra.mxu0 %v683
    %967 = vmatpush.bf16.msra.mxu0 %v679
    %968 = vmatpush.bf16.msra.mxu0 %v675
    %969 = vmatpush.bf16.msra.mxu0 %v671
    %970 = vmatpush.bf16.msra.mxu0 %v667
    %971 = vmatpush.bf16.msra.mxu0 %v663
    %972 = vmatpush.bf16.msra.mxu0 %v659
    %973 = vmatmul.bf16.gmra.mxu0 %v259
    %v974 = vpop.f32.mrf.mxu0
    %v975 = vadd.f32 %v363, %v974
    %v976 = vpop.f32.mrf.mxu0
    %977 = vdwg.mxu0
    %978 = vmatpush.bf16.msra.mxu0 %v719
    %979 = vmatpush.bf16.msra.mxu0 %v715
    %980 = vmatpush.bf16.msra.mxu0 %v711
    %981 = vmatpush.bf16.msra.mxu0 %v707
    %982 = vmatpush.bf16.msra.mxu0 %v703
    %983 = vmatpush.bf16.msra.mxu0 %v699
    %984 = vmatpush.bf16.msra.mxu0 %v695
    %985 = vmatpush.bf16.msra.mxu0 %v691
    %986 = vmatmul.bf16.gmra.mxu0 %v260
    %v987 = vpop.f32.mrf.mxu0
    %v988 = vadd.f32 %v975, %v987
    %v989 = vpop.f32.mrf.mxu0
    %990 = vdwg.mxu0
    %991 = vmatpush.bf16.msra.mxu0 %v751
    %992 = vmatpush.bf16.msra.mxu0 %v747
    %993 = vmatpush.bf16.msra.mxu0 %v743
    %994 = vmatpush.bf16.msra.mxu0 %v739
    %995 = vmatpush.bf16.msra.mxu0 %v735
    %996 = vmatpush.bf16.msra.mxu0 %v731
    %997 = vmatpush.bf16.msra.mxu0 %v727
    %998 = vmatpush.bf16.msra.mxu0 %v723
    %999 = vmatmul.bf16.gmra.mxu0 %v261
    %v1000 = vpop.f32.mrf.mxu0
    %v1001 = vadd.f32 %v988, %v1000
    %v1002 = vpop.f32.mrf.mxu0
    %1003 = vdwg.mxu0
    %v1004 = vxor.u32 %v884, 2147483648
    %v1005 = vmul.f32 %v1004, 1.442695
    %v1006 = vpow.pop %v1005
    %v1007 = vadd.f32 %v1006, 1.0
    %v1008 = vrcp.pop %v1007
    %v1009 = vmul.f32 %v1007, %v1008
    %v1010 = vsub.f32 1.0, %v1009
    %v1011 = vmul.f32 %v1008, %v1010
    %v1012 = vadd.f32 %v1008, %v1011
    %vm1013 = vweird.f32 %v1007
    %vm1014 = vweird.f32 %v1008
    %vm1015 = vmor %vm1013, %vm1014
    %v1016 = vsel %vm1015, %v1008, %v1012
    %v1017 = vand.u32 2147483647, %v1007
    %vm1018 = vcmp.eq.f32.partialorder %v1017, 8.507059e+37
    %v1019 = vand.u32 %v1007, 2147483648
    %v1020 = vor.u32 1.1754944e-38, %v1019
    %v1021 = vsel %vm1018, %v1020, %v1016
    %v1022 = vmul.f32 1.0, %v1021
    %v1023 = vxor.u32 %v923, 2147483648
    %v1024 = vmul.f32 %v1023, 1.442695
    %v1025 = vpow.pop %v1024
    %v1026 = vadd.f32 %v1025, 1.0
    %v1027 = vrcp.pop %v1026
    %v1028 = vmul.f32 %v1026, %v1027
    %v1029 = vsub.f32 1.0, %v1028
    %v1030 = vmul.f32 %v1027, %v1029
    %v1031 = vadd.f32 %v1027, %v1030
    %vm1032 = vweird.f32 %v1026
    %vm1033 = vweird.f32 %v1027
    %vm1034 = vmor %vm1032, %vm1033
    %v1035 = vsel %vm1034, %v1027, %v1031
    %v1036 = vand.u32 2147483647, %v1026
    %vm1037 = vcmp.eq.f32.partialorder %v1036, 8.507059e+37
    %v1038 = vand.u32 %v1026, 2147483648
    %v1039 = vor.u32 1.1754944e-38, %v1038
    %v1040 = vsel %vm1037, %v1039, %v1035
    %v1041 = vmul.f32 1.0, %v1040
    %v1042 = vtanh.pop %v962
    %v1043 = vxor.u32 %v1001, 2147483648
    %v1044 = vmul.f32 %v1043, 1.442695
    %v1045 = vpow.pop %v1044
    %v1046 = vadd.f32 %v1045, 1.0
    %v1047 = vrcp.pop %v1046
    %v1048 = vmul.f32 %v1046, %v1047
    %v1049 = vsub.f32 1.0, %v1048
    %v1050 = vmul.f32 %v1047, %v1049
    %v1051 = vadd.f32 %v1047, %v1050
    %vm1052 = vweird.f32 %v1046
    %vm1053 = vweird.f32 %v1047
    %vm1054 = vmor %vm1052, %vm1053
    %v1055 = vsel %vm1054, %v1047, %v1051
    %v1056 = vand.u32 2147483647, %v1046
    %vm1057 = vcmp.eq.f32.partialorder %v1056, 8.507059e+37
    %v1058 = vand.u32 %v1046, 2147483648
    %v1059 = vor.u32 1.1754944e-38, %v1058
    %v1060 = vsel %vm1057, %v1059, %v1055
    %v1061 = vmul.f32 1.0, %v1060
    %v1062 = vmul.f32 %v1041, %v256
    %v1063 = vmul.f32 %v1022, %v1042
    %v1064 = vadd.f32 %v1062, %v1063
    %v1065 = vtanh.pop %v1064
    %v1066 = vmul.f32 %v1061, %v1065
    %v1067 = vpack.c.bf16 %v1066, %v1066
    %v1068 = vpack.c.bf16 %v257, %v257
    %v1069 = vld [vmem:[#allocation18] sm:$0xff]
    %v1070 = vld [vmem:[#allocation18 + $0x8] sm:$0xff]
    %v1071 = vld [vmem:[#allocation18 + $0x10] sm:$0xff]
    %v1072 = vld [vmem:[#allocation18 + $0x18] sm:$0xff]
    %v1073 = vld [vmem:[#allocation18 + $0x20] sm:$0xff]
    %v1074 = vld [vmem:[#allocation18 + $0x28] sm:$0xff]
    %v1075 = vld [vmem:[#allocation18 + $0x30] sm:$0xff]
    %v1076 = vld [vmem:[#allocation18 + $0x38] sm:$0xff]
    %v1077 = vld [vmem:[#allocation18 + $0x40] sm:$0xff]
    %v1078 = vld [vmem:[#allocation18 + $0x48] sm:$0xff]
    %v1079 = vld [vmem:[#allocation18 + $0x50] sm:$0xff]
    %v1080 = vld [vmem:[#allocation18 + $0x58] sm:$0xff]
    %v1081 = vld [vmem:[#allocation18 + $0x60] sm:$0xff]
    %v1082 = vld [vmem:[#allocation18 + $0x68] sm:$0xff]
    %v1083 = vld [vmem:[#allocation18 + $0x70] sm:$0xff]
    %v1084 = vld [vmem:[#allocation18 + $0x78] sm:$0xff]
    %v1085 = vld [vmem:[#allocation18 + $0x80] sm:$0xff]
    %v1086 = vld [vmem:[#allocation18 + $0x88] sm:$0xff]
    %v1087 = vld [vmem:[#allocation18 + $0x90] sm:$0xff]
    %v1088 = vld [vmem:[#allocation18 + $0x98] sm:$0xff]
    %v1089 = vld [vmem:[#allocation18 + $0xa0] sm:$0xff]
    %v1090 = vld [vmem:[#allocation18 + $0xa8] sm:$0xff]
    %v1091 = vld [vmem:[#allocation18 + $0xb0] sm:$0xff]
    %v1092 = vld [vmem:[#allocation18 + $0xb8] sm:$0xff]
    %v1093 = vld [vmem:[#allocation18 + $0xc0] sm:$0xff]
    %v1094 = vld [vmem:[#allocation18 + $0xc8] sm:$0xff]
    %v1095 = vld [vmem:[#allocation18 + $0xd0] sm:$0xff]
    %v1096 = vld [vmem:[#allocation18 + $0xd8] sm:$0xff]
    %v1097 = vld [vmem:[#allocation18 + $0xe0] sm:$0xff]
    %v1098 = vld [vmem:[#allocation18 + $0xe8] sm:$0xff]
    %v1099 = vld [vmem:[#allocation18 + $0xf0] sm:$0xff]
    %v1100 = vld [vmem:[#allocation18 + $0xf8] sm:$0xff]
    %v1101 = vld [vmem:[#allocation18 + $0x100] sm:$0xff]
    %v1102 = vld [vmem:[#allocation18 + $0x108] sm:$0xff]
    %v1103 = vld [vmem:[#allocation18 + $0x110] sm:$0xff]
    %v1104 = vld [vmem:[#allocation18 + $0x118] sm:$0xff]
    %v1105 = vld [vmem:[#allocation18 + $0x120] sm:$0xff]
    %v1106 = vld [vmem:[#allocation18 + $0x128] sm:$0xff]
    %v1107 = vld [vmem:[#allocation18 + $0x130] sm:$0xff]
    %v1108 = vld [vmem:[#allocation18 + $0x138] sm:$0xff]
    %v1109 = vld [vmem:[#allocation18 + $0x140] sm:$0xff]
    %v1110 = vld [vmem:[#allocation18 + $0x148] sm:$0xff]
    %v1111 = vld [vmem:[#allocation18 + $0x150] sm:$0xff]
    %v1112 = vld [vmem:[#allocation18 + $0x158] sm:$0xff]
    %v1113 = vld [vmem:[#allocation18 + $0x160] sm:$0xff]
    %v1114 = vld [vmem:[#allocation18 + $0x168] sm:$0xff]
    %v1115 = vld [vmem:[#allocation18 + $0x170] sm:$0xff]
    %v1116 = vld [vmem:[#allocation18 + $0x178] sm:$0xff]
    %v1117 = vld [vmem:[#allocation18 + $0x180] sm:$0xff]
    %v1118 = vld [vmem:[#allocation18 + $0x188] sm:$0xff]
    %v1119 = vld [vmem:[#allocation18 + $0x190] sm:$0xff]
    %v1120 = vld [vmem:[#allocation18 + $0x198] sm:$0xff]
    %v1121 = vld [vmem:[#allocation18 + $0x1a0] sm:$0xff]
    %v1122 = vld [vmem:[#allocation18 + $0x1a8] sm:$0xff]
    %v1123 = vld [vmem:[#allocation18 + $0x1b0] sm:$0xff]
    %v1124 = vld [vmem:[#allocation18 + $0x1b8] sm:$0xff]
    %v1125 = vld [vmem:[#allocation18 + $0x1c0] sm:$0xff]
    %v1126 = vld [vmem:[#allocation18 + $0x1c8] sm:$0xff]
    %v1127 = vld [vmem:[#allocation18 + $0x1d0] sm:$0xff]
    %v1128 = vld [vmem:[#allocation18 + $0x1d8] sm:$0xff]
    %v1129 = vld [vmem:[#allocation18 + $0x1e0] sm:$0xff]
    %v1130 = vld [vmem:[#allocation18 + $0x1e8] sm:$0xff]
    %v1131 = vld [vmem:[#allocation18 + $0x1f0] sm:$0xff]
    %v1132 = vld [vmem:[#allocation18 + $0x1f8] sm:$0xff]
    %v1133 = vld [vmem:[%s11] sm:$0xf]
    %v1135 = vperm.slane %v1133, 0
    %v1136 = vperm.slane %v1133, 1
    %v1137 = vperm.slane %v1133, 2
    %v1138 = vperm.slane %v1133, 3
    %v1207 = vunpack.c.l.b16 %v1069
    %v1208 = vunpack.c.h.b16 %v1069
    %v1209 = vunpack.c.l.b16 %v1070
    %v1210 = vunpack.c.h.b16 %v1070
    %v1211 = vunpack.c.l.b16 %v1071
    %v1212 = vunpack.c.h.b16 %v1071
    %v1213 = vunpack.c.l.b16 %v1072
    %v1214 = vunpack.c.h.b16 %v1072
    %v1215 = vunpack.c.l.b16 %v1073
    %v1216 = vunpack.c.h.b16 %v1073
    %v1217 = vunpack.c.l.b16 %v1074
    %v1218 = vunpack.c.h.b16 %v1074
    %v1219 = vunpack.c.l.b16 %v1075
    %v1220 = vunpack.c.h.b16 %v1075
    %v1221 = vunpack.c.l.b16 %v1076
    %v1222 = vunpack.c.h.b16 %v1076
    %v1223 = vunpack.c.l.b16 %v1077
    %v1224 = vunpack.c.h.b16 %v1077
    %v1225 = vunpack.c.l.b16 %v1078
    %v1226 = vunpack.c.h.b16 %v1078
    %v1227 = vunpack.c.l.b16 %v1079
    %v1228 = vunpack.c.h.b16 %v1079
    %v1229 = vunpack.c.l.b16 %v1080
    %v1230 = vunpack.c.h.b16 %v1080
    %v1231 = vunpack.c.l.b16 %v1081
    %v1232 = vunpack.c.h.b16 %v1081
    %v1233 = vunpack.c.l.b16 %v1082
    %v1234 = vunpack.c.h.b16 %v1082
    %v1235 = vunpack.c.l.b16 %v1083
    %v1236 = vunpack.c.h.b16 %v1083
    %v1237 = vunpack.c.l.b16 %v1084
    %v1238 = vunpack.c.h.b16 %v1084
    %v1239 = vunpack.c.l.b16 %v1085
    %v1240 = vunpack.c.h.b16 %v1085
    %v1241 = vunpack.c.l.b16 %v1086
    %v1242 = vunpack.c.h.b16 %v1086
    %v1243 = vunpack.c.l.b16 %v1087
    %v1244 = vunpack.c.h.b16 %v1087
    %v1245 = vunpack.c.l.b16 %v1088
    %v1246 = vunpack.c.h.b16 %v1088
    %v1247 = vunpack.c.l.b16 %v1089
    %v1248 = vunpack.c.h.b16 %v1089
    %v1249 = vunpack.c.l.b16 %v1090
    %v1250 = vunpack.c.h.b16 %v1090
    %v1251 = vunpack.c.l.b16 %v1091
    %v1252 = vunpack.c.h.b16 %v1091
    %v1253 = vunpack.c.l.b16 %v1092
    %v1254 = vunpack.c.h.b16 %v1092
    %v1255 = vunpack.c.l.b16 %v1093
    %v1256 = vunpack.c.h.b16 %v1093
    %v1257 = vunpack.c.l.b16 %v1094
    %v1258 = vunpack.c.h.b16 %v1094
    %v1259 = vunpack.c.l.b16 %v1095
    %v1260 = vunpack.c.h.b16 %v1095
    %v1261 = vunpack.c.l.b16 %v1096
    %v1262 = vunpack.c.h.b16 %v1096
    %v1263 = vunpack.c.l.b16 %v1097
    %v1264 = vunpack.c.h.b16 %v1097
    %v1265 = vunpack.c.l.b16 %v1098
    %v1266 = vunpack.c.h.b16 %v1098
    %v1267 = vunpack.c.l.b16 %v1099
    %v1268 = vunpack.c.h.b16 %v1099
    %v1269 = vunpack.c.l.b16 %v1100
    %v1270 = vunpack.c.h.b16 %v1100
    %v1271 = vunpack.c.l.b16 %v1101
    %v1272 = vunpack.c.h.b16 %v1101
    %v1273 = vunpack.c.l.b16 %v1102
    %v1274 = vunpack.c.h.b16 %v1102
    %v1275 = vunpack.c.l.b16 %v1103
    %v1276 = vunpack.c.h.b16 %v1103
    %v1277 = vunpack.c.l.b16 %v1104
    %v1278 = vunpack.c.h.b16 %v1104
    %v1279 = vunpack.c.l.b16 %v1105
    %v1280 = vunpack.c.h.b16 %v1105
    %v1281 = vunpack.c.l.b16 %v1106
    %v1282 = vunpack.c.h.b16 %v1106
    %v1283 = vunpack.c.l.b16 %v1107
    %v1284 = vunpack.c.h.b16 %v1107
    %v1285 = vunpack.c.l.b16 %v1108
    %v1286 = vunpack.c.h.b16 %v1108
    %v1287 = vunpack.c.l.b16 %v1109
    %v1288 = vunpack.c.h.b16 %v1109
    %v1289 = vunpack.c.l.b16 %v1110
    %v1290 = vunpack.c.h.b16 %v1110
    %v1291 = vunpack.c.l.b16 %v1111
    %v1292 = vunpack.c.h.b16 %v1111
    %v1293 = vunpack.c.l.b16 %v1112
    %v1294 = vunpack.c.h.b16 %v1112
    %v1295 = vunpack.c.l.b16 %v1113
    %v1296 = vunpack.c.h.b16 %v1113
    %v1297 = vunpack.c.l.b16 %v1114
    %v1298 = vunpack.c.h.b16 %v1114
    %v1299 = vunpack.c.l.b16 %v1115
    %v1300 = vunpack.c.h.b16 %v1115
    %v1301 = vunpack.c.l.b16 %v1116
    %v1302 = vunpack.c.h.b16 %v1116
    %v1303 = vunpack.c.l.b16 %v1117
    %v1304 = vunpack.c.h.b16 %v1117
    %v1305 = vunpack.c.l.b16 %v1118
    %v1306 = vunpack.c.h.b16 %v1118
    %v1307 = vunpack.c.l.b16 %v1119
    %v1308 = vunpack.c.h.b16 %v1119
    %v1309 = vunpack.c.l.b16 %v1120
    %v1310 = vunpack.c.h.b16 %v1120
    %v1311 = vunpack.c.l.b16 %v1121
    %v1312 = vunpack.c.h.b16 %v1121
    %v1313 = vunpack.c.l.b16 %v1122
    %v1314 = vunpack.c.h.b16 %v1122
    %v1315 = vunpack.c.l.b16 %v1123
    %v1316 = vunpack.c.h.b16 %v1123
    %v1317 = vunpack.c.l.b16 %v1124
    %v1318 = vunpack.c.h.b16 %v1124
    %v1319 = vunpack.c.l.b16 %v1125
    %v1320 = vunpack.c.h.b16 %v1125
    %v1321 = vunpack.c.l.b16 %v1126
    %v1322 = vunpack.c.h.b16 %v1126
    %v1323 = vunpack.c.l.b16 %v1127
    %v1324 = vunpack.c.h.b16 %v1127
    %v1325 = vunpack.c.l.b16 %v1128
    %v1326 = vunpack.c.h.b16 %v1128
    %v1327 = vunpack.c.l.b16 %v1129
    %v1328 = vunpack.c.h.b16 %v1129
    %v1329 = vunpack.c.l.b16 %v1130
    %v1330 = vunpack.c.h.b16 %v1130
    %v1331 = vunpack.c.l.b16 %v1131
    %v1332 = vunpack.c.h.b16 %v1131
    %v1333 = vunpack.c.l.b16 %v1132
    %v1334 = vunpack.c.h.b16 %v1132
    %v1335 = vpack.c.b16 %v1211, %v1207
    %v1336 = vpack.c.b16 %v1212, %v1208
    %v1337 = vpack.c.b16 %v1213, %v1209
    %v1338 = vpack.c.b16 %v1214, %v1210
    %v1339 = vpack.c.b16 %v1219, %v1215
    %v1340 = vpack.c.b16 %v1220, %v1216
    %v1341 = vpack.c.b16 %v1221, %v1217
    %v1342 = vpack.c.b16 %v1222, %v1218
    %v1343 = vpack.c.b16 %v1227, %v1223
    %v1344 = vpack.c.b16 %v1228, %v1224
    %v1345 = vpack.c.b16 %v1229, %v1225
    %v1346 = vpack.c.b16 %v1230, %v1226
    %v1347 = vpack.c.b16 %v1235, %v1231
    %v1348 = vpack.c.b16 %v1236, %v1232
    %v1349 = vpack.c.b16 %v1237, %v1233
    %v1350 = vpack.c.b16 %v1238, %v1234
    %v1351 = vpack.c.b16 %v1243, %v1239
    %v1352 = vpack.c.b16 %v1244, %v1240
    %v1353 = vpack.c.b16 %v1245, %v1241
    %v1354 = vpack.c.b16 %v1246, %v1242
    %v1355 = vpack.c.b16 %v1251, %v1247
    %v1356 = vpack.c.b16 %v1252, %v1248
    %v1357 = vpack.c.b16 %v1253, %v1249
    %v1358 = vpack.c.b16 %v1254, %v1250
    %v1359 = vpack.c.b16 %v1259, %v1255
    %v1360 = vpack.c.b16 %v1260, %v1256
    %v1361 = vpack.c.b16 %v1261, %v1257
    %v1362 = vpack.c.b16 %v1262, %v1258
    %v1363 = vpack.c.b16 %v1267, %v1263
    %v1364 = vpack.c.b16 %v1268, %v1264
    %v1365 = vpack.c.b16 %v1269, %v1265
    %v1366 = vpack.c.b16 %v1270, %v1266
    %v1367 = vpack.c.b16 %v1275, %v1271
    %v1368 = vpack.c.b16 %v1276, %v1272
    %v1369 = vpack.c.b16 %v1277, %v1273
    %v1370 = vpack.c.b16 %v1278, %v1274
    %v1371 = vpack.c.b16 %v1283, %v1279
    %v1372 = vpack.c.b16 %v1284, %v1280
    %v1373 = vpack.c.b16 %v1285, %v1281
    %v1374 = vpack.c.b16 %v1286, %v1282
    %v1375 = vpack.c.b16 %v1291, %v1287
    %v1376 = vpack.c.b16 %v1292, %v1288
    %v1377 = vpack.c.b16 %v1293, %v1289
    %v1378 = vpack.c.b16 %v1294, %v1290
    %v1379 = vpack.c.b16 %v1299, %v1295
    %v1380 = vpack.c.b16 %v1300, %v1296
    %v1381 = vpack.c.b16 %v1301, %v1297
    %v1382 = vpack.c.b16 %v1302, %v1298
    %v1383 = vpack.c.b16 %v1307, %v1303
    %v1384 = vpack.c.b16 %v1308, %v1304
    %v1385 = vpack.c.b16 %v1309, %v1305
    %v1386 = vpack.c.b16 %v1310, %v1306
    %v1387 = vpack.c.b16 %v1315, %v1311
    %v1388 = vpack.c.b16 %v1316, %v1312
    %v1389 = vpack.c.b16 %v1317, %v1313
    %v1390 = vpack.c.b16 %v1318, %v1314
    %v1391 = vpack.c.b16 %v1323, %v1319
    %v1392 = vpack.c.b16 %v1324, %v1320
    %v1393 = vpack.c.b16 %v1325, %v1321
    %v1394 = vpack.c.b16 %v1326, %v1322
    %v1395 = vpack.c.b16 %v1331, %v1327
    %v1396 = vpack.c.b16 %v1332, %v1328
    %v1397 = vpack.c.b16 %v1333, %v1329
    %v1398 = vpack.c.b16 %v1334, %v1330
    %1463 = vmatpush.bf16.msra.mxu0 %v1363
    %1464 = vmatpush.bf16.msra.mxu0 %v1359
    %1465 = vmatpush.bf16.msra.mxu0 %v1355
    %1466 = vmatpush.bf16.msra.mxu0 %v1351
    %1467 = vmatpush.bf16.msra.mxu0 %v1347
    %1468 = vmatpush.bf16.msra.mxu0 %v1343
    %1469 = vmatpush.bf16.msra.mxu0 %v1339
    %1470 = vmatpush.bf16.msra.mxu0 %v1335
    %1471 = vmatmul.bf16.gmra.mxu0 %v1067
    %v1472 = vpop.f32.mrf.mxu0
    %v1473 = vadd.f32 %v1135, %v1472
    %v1474 = vpop.f32.mrf.mxu0
    %1475 = vdwg.mxu0
    %1476 = vmatpush.bf16.msra.mxu0 %v1395
    %1477 = vmatpush.bf16.msra.mxu0 %v1391
    %1478 = vmatpush.bf16.msra.mxu0 %v1387
    %1479 = vmatpush.bf16.msra.mxu0 %v1383
    %1480 = vmatpush.bf16.msra.mxu0 %v1379
    %1481 = vmatpush.bf16.msra.mxu0 %v1375
    %1482 = vmatpush.bf16.msra.mxu0 %v1371
    %1483 = vmatpush.bf16.msra.mxu0 %v1367
    %1484 = vmatmul.bf16.gmra.mxu0 %v1068
    %v1485 = vpop.f32.mrf.mxu0
    %v1486 = vadd.f32 %v1473, %v1485
    %v1487 = vpop.f32.mrf.mxu0
    %1488 = vdwg.mxu0
    %1489 = vmatpush.bf16.msra.mxu0 %v1364
    %1490 = vmatpush.bf16.msra.mxu0 %v1360
    %1491 = vmatpush.bf16.msra.mxu0 %v1356
    %1492 = vmatpush.bf16.msra.mxu0 %v1352
    %1493 = vmatpush.bf16.msra.mxu0 %v1348
    %1494 = vmatpush.bf16.msra.mxu0 %v1344
    %1495 = vmatpush.bf16.msra.mxu0 %v1340
    %1496 = vmatpush.bf16.msra.mxu0 %v1336
    %1497 = vmatmul.bf16.gmra.mxu0 %v1067
    %v1498 = vpop.f32.mrf.mxu0
    %v1499 = vadd.f32 %v1136, %v1498
    %v1500 = vpop.f32.mrf.mxu0
    %1501 = vdwg.mxu0
    %1502 = vmatpush.bf16.msra.mxu0 %v1396
    %1503 = vmatpush.bf16.msra.mxu0 %v1392
    %1504 = vmatpush.bf16.msra.mxu0 %v1388
    %1505 = vmatpush.bf16.msra.mxu0 %v1384
    %1506 = vmatpush.bf16.msra.mxu0 %v1380
    %1507 = vmatpush.bf16.msra.mxu0 %v1376
    %1508 = vmatpush.bf16.msra.mxu0 %v1372
    %1509 = vmatpush.bf16.msra.mxu0 %v1368
    %1510 = vmatmul.bf16.gmra.mxu0 %v1068
    %v1511 = vpop.f32.mrf.mxu0
    %v1512 = vadd.f32 %v1499, %v1511
    %v1513 = vpop.f32.mrf.mxu0
    %1514 = vdwg.mxu0
    %1515 = vmatpush.bf16.msra.mxu0 %v1365
    %1516 = vmatpush.bf16.msra.mxu0 %v1361
    %1517 = vmatpush.bf16.msra.mxu0 %v1357
    %1518 = vmatpush.bf16.msra.mxu0 %v1353
    %1519 = vmatpush.bf16.msra.mxu0 %v1349
    %1520 = vmatpush.bf16.msra.mxu0 %v1345
    %1521 = vmatpush.bf16.msra.mxu0 %v1341
    %1522 = vmatpush.bf16.msra.mxu0 %v1337
    %1523 = vmatmul.bf16.gmra.mxu0 %v1067
    %v1524 = vpop.f32.mrf.mxu0
    %v1525 = vadd.f32 %v1137, %v1524
    %v1526 = vpop.f32.mrf.mxu0
    %1527 = vdwg.mxu0
    %1528 = vmatpush.bf16.msra.mxu0 %v1397
    %1529 = vmatpush.bf16.msra.mxu0 %v1393
    %1530 = vmatpush.bf16.msra.mxu0 %v1389
    %1531 = vmatpush.bf16.msra.mxu0 %v1385
    %1532 = vmatpush.bf16.msra.mxu0 %v1381
    %1533 = vmatpush.bf16.msra.mxu0 %v1377
    %1534 = vmatpush.bf16.msra.mxu0 %v1373
    %1535 = vmatpush.bf16.msra.mxu0 %v1369
    %1536 = vmatmul.bf16.gmra.mxu0 %v1068
    %v1537 = vpop.f32.mrf.mxu0
    %v1538 = vadd.f32 %v1525, %v1537
    %v1539 = vpop.f32.mrf.mxu0
    %1540 = vdwg.mxu0
    %1541 = vmatpush.bf16.msra.mxu0 %v1366
    %1542 = vmatpush.bf16.msra.mxu0 %v1362
    %1543 = vmatpush.bf16.msra.mxu0 %v1358
    %1544 = vmatpush.bf16.msra.mxu0 %v1354
    %1545 = vmatpush.bf16.msra.mxu0 %v1350
    %1546 = vmatpush.bf16.msra.mxu0 %v1346
    %1547 = vmatpush.bf16.msra.mxu0 %v1342
    %1548 = vmatpush.bf16.msra.mxu0 %v1338
    %1549 = vmatmul.bf16.gmra.mxu0 %v1067
    %v1550 = vpop.f32.mrf.mxu0
    %v1551 = vadd.f32 %v1138, %v1550
    %v1552 = vpop.f32.mrf.mxu0
    %1553 = vdwg.mxu0
    %1554 = vmatpush.bf16.msra.mxu0 %v1398
    %1555 = vmatpush.bf16.msra.mxu0 %v1394
    %1556 = vmatpush.bf16.msra.mxu0 %v1390
    %1557 = vmatpush.bf16.msra.mxu0 %v1386
    %1558 = vmatpush.bf16.msra.mxu0 %v1382
    %1559 = vmatpush.bf16.msra.mxu0 %v1378
    %1560 = vmatpush.bf16.msra.mxu0 %v1374
    %1561 = vmatpush.bf16.msra.mxu0 %v1370
    %1562 = vmatmul.bf16.gmra.mxu0 %v1068
    %v1563 = vpop.f32.mrf.mxu0
    %v1564 = vadd.f32 %v1551, %v1563
    %v1565 = vpop.f32.mrf.mxu0
    %1566 = vdwg.mxu0
    %v1567 = vxor.u32 %v1486, 2147483648
    %v1568 = vmul.f32 %v1567, 1.442695
    %v1569 = vpow.pop %v1568
    %v1570 = vadd.f32 %v1569, 1.0
    %v1571 = vrcp.pop %v1570
    %v1572 = vmul.f32 %v1570, %v1571
    %v1573 = vsub.f32 1.0, %v1572
    %v1574 = vmul.f32 %v1571, %v1573
    %v1575 = vadd.f32 %v1571, %v1574
    %vm1576 = vweird.f32 %v1570
    %vm1577 = vweird.f32 %v1571
    %vm1578 = vmor %vm1576, %vm1577
    %v1579 = vsel %vm1578, %v1571, %v1575
    %v1580 = vand.u32 2147483647, %v1570
    %vm1581 = vcmp.eq.f32.partialorder %v1580, 8.507059e+37
    %v1582 = vand.u32 %v1570, 2147483648
    %v1583 = vor.u32 1.1754944e-38, %v1582
    %v1584 = vsel %vm1581, %v1583, %v1579
    %v1585 = vmul.f32 1.0, %v1584
    %v1586 = vxor.u32 %v1512, 2147483648
    %v1587 = vmul.f32 %v1586, 1.442695
    %v1588 = vpow.pop %v1587
    %v1589 = vadd.f32 %v1588, 1.0
    %v1590 = vrcp.pop %v1589
    %v1591 = vmul.f32 %v1589, %v1590
    %v1592 = vsub.f32 1.0, %v1591
    %v1593 = vmul.f32 %v1590, %v1592
    %v1594 = vadd.f32 %v1590, %v1593
    %vm1595 = vweird.f32 %v1589
    %vm1596 = vweird.f32 %v1590
    %vm1597 = vmor %vm1595, %vm1596
    %v1598 = vsel %vm1597, %v1590, %v1594
    %v1599 = vand.u32 2147483647, %v1589
    %vm1600 = vcmp.eq.f32.partialorder %v1599, 8.507059e+37
    %v1601 = vand.u32 %v1589, 2147483648
    %v1602 = vor.u32 1.1754944e-38, %v1601
    %v1603 = vsel %vm1600, %v1602, %v1598
    %v1604 = vmul.f32 1.0, %v1603
    %v1605 = vtanh.pop %v1538
    %v1606 = vxor.u32 %v1564, 2147483648
    %v1607 = vmul.f32 %v1606, 1.442695
    %v1608 = vpow.pop %v1607
    %v1609 = vadd.f32 %v1608, 1.0
    %v1610 = vrcp.pop %v1609
    %v1611 = vmul.f32 %v1609, %v1610
    %v1612 = vsub.f32 1.0, %v1611
    %v1613 = vmul.f32 %v1610, %v1612
    %v1614 = vadd.f32 %v1610, %v1613
    %vm1615 = vweird.f32 %v1609
    %vm1616 = vweird.f32 %v1610
    %vm1617 = vmor %vm1615, %vm1616
    %v1618 = vsel %vm1617, %v1610, %v1614
    %v1619 = vand.u32 2147483647, %v1609
    %vm1620 = vcmp.eq.f32.partialorder %v1619, 8.507059e+37
    %v1621 = vand.u32 %v1609, 2147483648
    %v1622 = vor.u32 1.1754944e-38, %v1621
    %v1623 = vsel %vm1620, %v1622, %v1618
    %v1624 = vmul.f32 1.0, %v1623
    %v1625 = vmul.f32 %v1604, %v258
    %v1626 = vmul.f32 %v1585, %v1605
    %v1627 = vadd.f32 %v1625, %v1626
    %v1628 = vtanh.pop %v1627
    %v1629 = vmul.f32 %v1624, %v1628
    %v1630 = vpack.c.bf16 %v1629, %v1629
    %v1631 = vld [vmem:[#allocation15] sm:$0xff]
    %v1632 = vld [vmem:[#allocation15 + $0x8] sm:$0xff]
    %v1633 = vld [vmem:[#allocation15 + $0x10] sm:$0xff]
    %v1634 = vld [vmem:[#allocation15 + $0x18] sm:$0xff]
    %v1635 = vld [vmem:[#allocation15 + $0x20] sm:$0xff]
    %v1636 = vld [vmem:[#allocation15 + $0x28] sm:$0xff]
    %v1637 = vld [vmem:[#allocation15 + $0x30] sm:$0xff]
    %v1638 = vld [vmem:[#allocation15 + $0x38] sm:$0xff]
    %v1639 = vld [vmem:[#allocation15 + $0x40] sm:$0xff]
    %v1640 = vld [vmem:[#allocation15 + $0x48] sm:$0xff]
    %v1641 = vld [vmem:[#allocation15 + $0x50] sm:$0xff]
    %v1642 = vld [vmem:[#allocation15 + $0x58] sm:$0xff]
    %v1643 = vld [vmem:[#allocation15 + $0x60] sm:$0xff]
    %v1644 = vld [vmem:[#allocation15 + $0x68] sm:$0xff]
    %v1645 = vld [vmem:[#allocation15 + $0x70] sm:$0xff]
    %v1646 = vld [vmem:[#allocation15 + $0x78] sm:$0xff]
    %v1647 = vld [vmem:[%s12] sm:$0x3]
    %v1649 = vperm.slane %v1647, 0
    %v1650 = vperm.slane %v1647, 1
    %v1669 = vunpack.c.l.b16 %v1631
    %v1670 = vunpack.c.h.b16 %v1631
    %v1671 = vunpack.c.l.b16 %v1632
    %v1672 = vunpack.c.h.b16 %v1632
    %v1673 = vunpack.c.l.b16 %v1633
    %v1674 = vunpack.c.h.b16 %v1633
    %v1675 = vunpack.c.l.b16 %v1634
    %v1676 = vunpack.c.h.b16 %v1634
    %v1677 = vunpack.c.l.b16 %v1635
    %v1678 = vunpack.c.h.b16 %v1635
    %v1679 = vunpack.c.l.b16 %v1636
    %v1680 = vunpack.c.h.b16 %v1636
    %v1681 = vunpack.c.l.b16 %v1637
    %v1682 = vunpack.c.h.b16 %v1637
    %v1683 = vunpack.c.l.b16 %v1638
    %v1684 = vunpack.c.h.b16 %v1638
    %v1685 = vunpack.c.l.b16 %v1639
    %v1686 = vunpack.c.h.b16 %v1639
    %v1687 = vunpack.c.l.b16 %v1640
    %v1688 = vunpack.c.h.b16 %v1640
    %v1689 = vunpack.c.l.b16 %v1641
    %v1690 = vunpack.c.h.b16 %v1641
    %v1691 = vunpack.c.l.b16 %v1642
    %v1692 = vunpack.c.h.b16 %v1642
    %v1693 = vunpack.c.l.b16 %v1643
    %v1694 = vunpack.c.h.b16 %v1643
    %v1695 = vunpack.c.l.b16 %v1644
    %v1696 = vunpack.c.h.b16 %v1644
    %v1697 = vunpack.c.l.b16 %v1645
    %v1698 = vunpack.c.h.b16 %v1645
    %v1699 = vunpack.c.l.b16 %v1646
    %v1700 = vunpack.c.h.b16 %v1646
    %v1701 = vpack.c.b16 %v1671, %v1669
    %v1702 = vpack.c.b16 %v1672, %v1670
    %v1703 = vpack.c.b16 %v1675, %v1673
    %v1704 = vpack.c.b16 %v1676, %v1674
    %v1705 = vpack.c.b16 %v1679, %v1677
    %v1706 = vpack.c.b16 %v1680, %v1678
    %v1707 = vpack.c.b16 %v1683, %v1681
    %v1708 = vpack.c.b16 %v1684, %v1682
    %v1709 = vpack.c.b16 %v1687, %v1685
    %v1710 = vpack.c.b16 %v1688, %v1686
    %v1711 = vpack.c.b16 %v1691, %v1689
    %v1712 = vpack.c.b16 %v1692, %v1690
    %v1713 = vpack.c.b16 %v1695, %v1693
    %v1714 = vpack.c.b16 %v1696, %v1694
    %v1715 = vpack.c.b16 %v1699, %v1697
    %v1716 = vpack.c.b16 %v1700, %v1698
    %1733 = vmatpush.bf16.msra.mxu0 %v1715
    %1734 = vmatpush.bf16.msra.mxu0 %v1713
    %1735 = vmatpush.bf16.msra.mxu0 %v1711
    %1736 = vmatpush.bf16.msra.mxu0 %v1709
    %1737 = vmatpush.bf16.msra.mxu0 %v1707
    %1738 = vmatpush.bf16.msra.mxu0 %v1705
    %1739 = vmatpush.bf16.msra.mxu0 %v1703
    %1740 = vmatpush.bf16.msra.mxu0 %v1701
    %1741 = vmatmul.bf16.gmra.mxu0 %v1630
    %v1742 = vpop.f32.mrf.mxu0
    %v1743 = vadd.f32 %v1649, %v1742
    %v1744 = vpop.f32.mrf.mxu0
    %1745 = vdwg.mxu0
    %1746 = vmatpush.bf16.msra.mxu0 %v1716
    %1747 = vmatpush.bf16.msra.mxu0 %v1714
    %1748 = vmatpush.bf16.msra.mxu0 %v1712
    %1749 = vmatpush.bf16.msra.mxu0 %v1710
    %1750 = vmatpush.bf16.msra.mxu0 %v1708
    %1751 = vmatpush.bf16.msra.mxu0 %v1706
    %1752 = vmatpush.bf16.msra.mxu0 %v1704
    %1753 = vmatpush.bf16.msra.mxu0 %v1702
    %1754 = vmatmul.bf16.gmra.mxu0 %v1630
    %v1755 = vpop.f32.mrf.mxu0
    %v1756 = vadd.f32 %v1650, %v1755
    %v1757 = vpop.f32.mrf.mxu0
    %1758 = vdwg.mxu0
    %1759 = vst [vmem:[#allocation19] sm:$0xff] %v1743
    %1760 = vst [vmem:[#allocation19 + $0x8] sm:$0xff] %v1756
    %1761 = vst [vmem:[#allocation20] sm:$0xff] %v1066
    %1762 = vst [vmem:[#allocation22] sm:$0xff] %v1064
    %1763 = vst [vmem:[#allocation23] sm:$0xff] %v1629
    %1764 = vst [vmem:[#allocation25] sm:$0xff] %v1627
    // Predicated region
    $region94: #{tpu_custom_call.1} parent=1 // pred_check
      _
    $region95: #{tpu_custom_call.1} parent=1 // pred_check_branch
      %1766 = sbr.rel (0) target = $region97
    $region96: #{tpu_custom_call.1} parent=1 // pred_region
      %1768 = vsyncadd [#allocation4], 0
      %s1770 = sshll.u32 [#allocation19], 4
      %s1771 = int_to_ptr.vmem [resolvable:$true] %s1770
      %s1772 = sshll.u32 %s13, 4
      %s1773 = int_to_ptr.hbm [resolvable:$true] %s1772
      %1775 = dma.vmem_to_hbm [thread:$0]  %s1771, 256, %s1773, [#allocation4]
    $region97: #{tpu_custom_call.1} parent=1 // pred_fallthru
      _
    // Predicated region
    $region98: #{tpu_custom_call.1} parent=1 // pred_check
      _
    $region99: #{tpu_custom_call.1} parent=1 // pred_check_branch
      %1777 = sbr.rel (0) target = $region101
    $region100: #{tpu_custom_call.1} parent=1 // pred_region
      %1779 = vsyncadd [#allocation21], 0
      %s1781 = sshll.u32 [#allocation20], 4
      %s1782 = int_to_ptr.vmem [resolvable:$true] %s1781
      %s1783 = sshll.u32 %s14, 4
      %s1784 = int_to_ptr.hbm [resolvable:$true] %s1783
      %1786 = dma.vmem_to_hbm [thread:$0]  %s1782, 128, %s1784, [#allocation21]
    $region101: #{tpu_custom_call.1} parent=1 // pred_fallthru
      _
    // Predicated region
    $region102: #{tpu_custom_call.1} parent=1 // pred_check
      _
    $region103: #{tpu_custom_call.1} parent=1 // pred_check_branch
      %1788 = sbr.rel (0) target = $region105
    $region104: #{tpu_custom_call.1} parent=1 // pred_region
      %1790 = vsyncadd [#allocation21], 0
      %s1792 = sshll.u32 [#allocation22], 4
      %s1793 = int_to_ptr.vmem [resolvable:$true] %s1792
      %s1794 = sshll.u32 %s15, 4
      %s1795 = int_to_ptr.hbm [resolvable:$true] %s1794
      %1797 = dma.vmem_to_hbm [thread:$0]  %s1793, 128, %s1795, [#allocation21]
    $region105: #{tpu_custom_call.1} parent=1 // pred_fallthru
      _
    // Predicated region
    $region106: #{tpu_custom_call.1} parent=1 // pred_check
      _
    $region107: #{tpu_custom_call.1} parent=1 // pred_check_branch
      %1799 = sbr.rel (0) target = $region109
    $region108: #{tpu_custom_call.1} parent=1 // pred_region
      %1801 = vsyncadd [#allocation24], 0
      %s1803 = sshll.u32 [#allocation23], 4
      %s1804 = int_to_ptr.vmem [resolvable:$true] %s1803
      %s1805 = sshll.u32 %s16, 4
      %s1806 = int_to_ptr.hbm [resolvable:$true] %s1805
      %1808 = dma.vmem_to_hbm [thread:$0]  %s1804, 128, %s1806, [#allocation24]
    $region109: #{tpu_custom_call.1} parent=1 // pred_fallthru
      _
    // Predicated region
    $region110: #{tpu_custom_call.1} parent=1 // pred_check
      _
    $region111: #{tpu_custom_call.1} parent=1 // pred_check_branch
      %1810 = sbr.rel (0) target = $region113
    $region112: #{tpu_custom_call.1} parent=1 // pred_region
      %1812 = vsyncadd [#allocation24], 0
      %s1814 = sshll.u32 [#allocation25], 4
      %s1815 = int_to_ptr.vmem [resolvable:$true] %s1814
      %s1816 = sshll.u32 %s17, 4
      %s1817 = int_to_ptr.hbm [resolvable:$true] %s1816
      %1819 = dma.vmem_to_hbm [thread:$0]  %s1815, 128, %s1817, [#allocation24]
    $region113: #{tpu_custom_call.1} parent=1 // pred_fallthru
      _
    // Predicated region
    $region114: #{tpu_custom_call.1} parent=1 // pred_check
      _
    $region115: #{tpu_custom_call.1} parent=1 // pred_check_branch
      %1821 = sbr.rel (0) target = $region117
    $region116: #{tpu_custom_call.1} parent=1 // pred_region
      %1823 = dma.done [#allocation4], 256
    $region117: #{tpu_custom_call.1} parent=1 // pred_fallthru
      _
    // Predicated region
    $region118: #{tpu_custom_call.1} parent=1 // pred_check
      _
    $region119: #{tpu_custom_call.1} parent=1 // pred_check_branch
      %1825 = sbr.rel (0) target = $region121
    $region120: #{tpu_custom_call.1} parent=1 // pred_region
      %1827 = dma.done [#allocation21], 128
    $region121: #{tpu_custom_call.1} parent=1 // pred_fallthru
      _
    // Predicated region
    $region122: #{tpu_custom_call.1} parent=1 // pred_check
      _
    $region123: #{tpu_custom_call.1} parent=1 // pred_check_branch
      %1829 = sbr.rel (0) target = $region125
    $region124: #{tpu_custom_call.1} parent=1 // pred_region
      %1831 = dma.done [#allocation21], 128
    $region125: #{tpu_custom_call.1} parent=1 // pred_fallthru
      _
    // Predicated region
    $region126: #{tpu_custom_call.1} parent=1 // pred_check
      _
    $region127: #{tpu_custom_call.1} parent=1 // pred_check_branch
      %1833 = sbr.rel (0) target = $region129
    $region128: #{tpu_custom_call.1} parent=1 // pred_region
      %1835 = dma.done [#allocation24], 128
    $region129: #{tpu_custom_call.1} parent=1 // pred_fallthru
      _
    // Predicated region
    $region130: #{tpu_custom_call.1} parent=1 // pred_check
      _
    $region131: #{tpu_custom_call.1} parent=1 // pred_check_branch
      %1837 = sbr.rel (0) target = $region133
    $region132: #{tpu_custom_call.1} parent=1 // pred_region
      %1839 = dma.done [#allocation24], 128
    $region133: #{tpu_custom_call.1} parent=1 // pred_fallthru
      _
    %1840 = vsyncpa [#allocation3], 1
    %1841 = vsyncpa [#allocation8], 1
    %1842 = vsyncpa [#allocation11], 1
    %1843 = vsyncpa [#allocation14], 1
    %1844 = vsyncpa [#allocation17], 1
    %1845 = vsyncpa [#allocation4], 1
    %1846 = vsyncpa [#allocation21], 1
    %1847 = vsyncpa [#allocation24], 1
    %1848 = vsyncpa [#allocation5], 1

</llo_original>
